<compile_context>
chip_gen: v7x
topology: tpu7x:2x2x1
jax: 0.10.0
libtpu: 0.0.40
codegen_flags: <defaults>
</compile_context>

<pallas_src>
import functools

import jax
import jax.numpy as jnp
from jax.experimental import pallas as pl
from jax.experimental.pallas import tpu as pltpu


# ----------------------------------------------------------------------------- kernel


def _bottleneck_kernel(x_ref, w1_ref, b1_ref, w2_ref, b2_ref, w3_ref, b3_ref,
                       o_ref, h1_ref, *, H, TH, W, dilation, num_tiles):
    """Fused bottleneck for one (batch, row-tile) grid step.

    x_ref : (TH+2d, W, Cin)   input row tile with H-halo (f32)
    w1    : (Cin, P)          1x1 conv (BN1 scale folded in), compute dtype
    w2    : (3, 3P, P)        3x3 dilated conv, kw folded into K (BN2 folded)
    w3    : (P, Cout)         1x1 conv (BN3 scale folded in)
    b1/b2/b3 : (1, C)         folded BN biases (f32)
    o_ref : (TH, W, Cout)     output row tile
    h1_ref: (TH+2d, W, P)     VMEM scratch holding conv1 activations (+ halo)
    """
    d = dilation
    TH2 = TH + 2 * d
    Cin = x_ref.shape[-1]
    P = w1_ref.shape[-1]
    Cout = w3_ref.shape[-1]
    cdt = w1_ref.dtype                      # MXU compute dtype (f32 or bf16)
    t = pl.program_id(1)

    # ---- conv1 (1x1) + bn1 + relu over all TH2 rows (halo included) ----
    x_all = x_ref[...].reshape(TH2 * W, Cin).astype(cdt)
    h1 = jnp.dot(x_all, w1_ref[...], preferred_element_type=jnp.float32)
    h1 = jnp.maximum(h1 + b1_ref[...], 0.0)
    h1_ref[...] = h1.reshape(TH2, W, P).astype(cdt)

    # conv2's zero padding along H: halo rows that fall outside the image must
    # be zero.  Only the first / last row tiles have such rows and the row
    # ranges are static, so this is two cheap conditional strip stores.
    if d > 0:
        @pl.when(t == 0)
        def _():
            h1_ref[0:d, :, :] = jnp.zeros((d, W, P), cdt)
    last_start = H + d - (num_tiles - 1) * TH          # static python int
    if last_start < TH2:
        @pl.when(t == num_tiles - 1)
        def _():
            h1_ref[last_start:TH2, :, :] = jnp.zeros((TH2 - last_start, W, P), cdt)

    # ---- conv2 (3x3, dilation=d, padding=d) + bn2 + relu ----
    # kw-im2col: columns shifted by -d / 0 / +d (zero-padded along W), stacked
    # on the channel (lane) axis -> 3 matmuls with K = 3*P instead of 9 with K=P.
    h1v = h1_ref[...]
    zcol = jnp.zeros((TH2, d, P), cdt)
    left = jnp.concatenate([zcol, h1v[:, :W - d, :]], axis=1)    # j - d
    right = jnp.concatenate([h1v[:, d:, :], zcol], axis=1)       # j + d
    cols = jnp.concatenate([left, h1v, right], axis=-1)          # (TH2, W, 3P)

    acc = jnp.zeros((TH * W, P), jnp.float32)
    for kh in range(3):                                          # leading-dim slices: free
        slab = cols[kh * d:kh * d + TH].reshape(TH * W, 3 * P)
        acc = acc + jnp.dot(slab, w2_ref[kh],
                            preferred_element_type=jnp.float32)
    h2 = jnp.maximum(acc + b2_ref[...], 0.0)

    # ---- conv3 (1x1) + bn3 + residual add + relu (all f32 except MXU operands) ----
    h3 = jnp.dot(h2.astype(cdt), w3_ref[...],
                 preferred_element_type=jnp.float32)
    res = x_ref[d:d + TH, :, :].reshape(TH * W, Cin).astype(jnp.float32)
    out = jnp.maximum(h3 + b3_ref[...] + res, 0.0)
    o_ref[...] = out.reshape(TH, W, Cout).astype(o_ref.dtype)


# ----------------------------------------------------------------------------- wrapper


def _vmem_capacity_bytes():
    try:
        info = pltpu.get_tpu_info()
        for name in ("vmem_capacity_bytes", "vmem_bytes", "vmem_size_bytes"):
            v = getattr(info, name, None)
            if v:
                return int(v)
    except Exception:
        pass
    return 64 * 1024 * 1024          # conservative default (v7x physical VMEM)


def _step_vmem_bytes(TH, W, Cin, P, Cout, d, cdt_bytes):
    """Rough per-grid-step VMEM footprint (double-buffered blocks + scratch + temps)."""
    TH2 = TH + 2 * d
    blocks = 2 * TH2 * W * Cin * 4 + 2 * TH * W * Cout * 4
    weights = 2 * (Cin * P + 9 * P * P + P * Cout) * cdt_bytes
    scratch = TH2 * W * P * cdt_bytes
    temps = TH2 * W * 3 * P * (cdt_bytes + 4) + 4 * TH * W * max(Cin, 3 * P) * 4
    return blocks + weights + scratch + temps


def _choose_row_tile(H, W, Cin, P, Cout, d, cdt_bytes, budget, target=None):
    """Largest row tile <= target that fits the VMEM budget and keeps the
    boundary-row zeroing ranges static (TH >= d and H % TH in {0} ∪ [d, TH))."""
    hi = max(1, min(H if target is None else target, H))
    TH = H                                    # fallback: single tile
    for cand in range(hi, 0, -1):
        if cand < d:
            break
        if (H % cand == 0 or H % cand >= d) and \
                _step_vmem_bytes(cand, W, Cin, P, Cout, d, cdt_bytes) <= budget:
            TH = cand
            break
    return TH


def prepare_kernel_params(params, compute_dtype=jnp.float32):
    """Fold frozen-BN scales into the conv weights; reshape conv2 for kw-im2col."""
    (w1, s1, b1, w2, s2, b2, w3, s3, b3) = params
    P = w1.shape[-1]
    w1f = (w1 * s1).astype(compute_dtype)                            # (Cin, P)
    w2f = (w2 * s2.reshape(1, 1, 1, -1)).reshape(3, 3 * P, -1)       # (3, 3P, P)
    w2f = w2f.astype(compute_dtype)
    w3f = (w3 * s3).astype(compute_dtype)                            # (P, Cout)
    return (w1f, b1.astype(jnp.float32),
            w2f, b2.astype(jnp.float32),
            w3f, b3.astype(jnp.float32))


@functools.partial(jax.jit, static_argnames=("dilation", "row_tile", "compute_dtype"))
def bottleneck_forward(x_nchw, params, *, dilation=1, row_tile=None,
                       compute_dtype=jnp.float32):
    """x_nchw: (N, Cin, H, W) float32 (PyTorch layout). Returns (N, Cin, H, W)."""
    (w1, s1, b1, w2, s2, b2, w3, s3, b3) = params
    N, Cin, H, W = x_nchw.shape
    P = w1.shape[-1]
    Cout = w3.shape[-1]
    assert Cout == Cin, "downsample=None requires inplanes == planes * 4"
    d = dilation

    w1f, b1f, w2f, b2f, w3f, b3f = prepare_kernel_params(params, compute_dtype)
    cdt_bytes = jnp.dtype(compute_dtype).itemsize

    cap = _vmem_capacity_bytes()
    TH = _choose_row_tile(H, W, Cin, P, Cout, d, cdt_bytes,
                          budget=int(0.45 * cap), target=row_tile)
    T = -(-H // TH)
    TH2 = TH + 2 * d
    Hp = T * TH

    vmem_limit = int(min(
        max(2 * _step_vmem_bytes(TH, W, Cin, P, Cout, d, cdt_bytes),
            32 * 1024 * 1024),
        int(0.9 * cap)))

    # NCHW -> NHWC (channels on the 128-lane axis).
    x = jnp.transpose(x_nchw, (0, 2, 3, 1))

    # Materialise overlapping row tiles with a d-row H-halo (zero outside the
    # image) so every BlockSpec is a plain Blocked spec and stays pipelined.
    xpad = jnp.pad(x, ((0, 0), (d, d + Hp - H), (0, 0), (0, 0)))
    ridx = jnp.arange(T)[:, None] * TH + jnp.arange(TH2)[None, :]
    x_tiles = xpad[:, ridx]                                   # (N, T, TH2, W, Cin)

    kernel = functools.partial(_bottleneck_kernel, H=H, TH=TH, W=W,
                               dilation=d, num_tiles=T)

    flops = 2 * N * H * W * (Cin * P + 9 * P * P + P * Cout)
    bytes_accessed = (x_tiles.size + N * Hp * W * Cout) * 4 + \
        (w1f.size + w2f.size + w3f.size) * cdt_bytes

    def _const_spec(arr):
        nd = arr.ndim
        return pl.BlockSpec(arr.shape, lambda n, t, _nd=nd: (0,) * _nd)

    out_tiles = pl.pallas_call(
        kernel,
        out_shape=jax.ShapeDtypeStruct((N, T, TH, W, Cout), x.dtype),
        grid_spec=pltpu.PrefetchScalarGridSpec(
            num_scalar_prefetch=0,
            grid=(N, T),
            in_specs=[
                pl.BlockSpec((None, None, TH2, W, Cin),
                             lambda n, t: (n, t, 0, 0, 0)),
                _const_spec(w1f), _const_spec(b1f),
                _const_spec(w2f), _const_spec(b2f),
                _const_spec(w3f), _const_spec(b3f),
            ],
            out_specs=pl.BlockSpec((None, None, TH, W, Cout),
                                   lambda n, t: (n, t, 0, 0, 0)),
            scratch_shapes=[pltpu.VMEM((TH2, W, P), compute_dtype)],
        ),
        compiler_params=pltpu.CompilerParams(
            dimension_semantics=("parallel", "parallel"),
            vmem_limit_bytes=vmem_limit),
        cost_estimate=pl.CostEstimate(flops=flops, transcendentals=0,
                                      bytes_accessed=bytes_accessed),
    )(x_tiles, w1f, b1f, w2f, b2f, w3f, b3f)

    out = out_tiles.reshape(N, Hp, W, Cout)[:, :H]
    return jnp.transpose(out, (0, 3, 1, 2))                   # -> NCHW


# ----------------------------------------------------------------------------- params / reference


def init_params(key, inplanes, planes, eps=1e-5):
    """Deterministic synthetic parameters (PyTorch shapes folded for JAX layouts)."""
    ks = jax.random.split(key, 15)
    exp = 4

    w1_pt = 0.1 * jax.random.normal(ks[0], (planes, inplanes), jnp.float32)
    w2_pt = 0.1 * jax.random.normal(ks[1], (planes, planes, 3, 3), jnp.float32)
    w3_pt = 0.1 * jax.random.normal(ks[2], (planes * exp, planes), jnp.float32)

    w1 = jnp.transpose(w1_pt, (1, 0))                 # (Cin, P)
    w2 = jnp.transpose(w2_pt, (2, 3, 1, 0))           # (3, 3, P_in, P_out) HWIO
    w3 = jnp.transpose(w3_pt, (1, 0))                 # (P, 4P)

    def frozen_bn(kg, kb, km, kv, C):
        gamma = 1.0 + 0.1 * jax.random.normal(kg, (C,), jnp.float32)
        beta = 0.1 * jax.random.normal(kb, (C,), jnp.float32)
        rmean = 0.1 * jax.random.normal(km, (C,), jnp.float32)
        rvar = jax.random.uniform(kv, (C,), jnp.float32, minval=0.5, maxval=1.5)
        scale = gamma / jnp.sqrt(rvar + eps)
        bias = beta - rmean * scale
        return scale.reshape(1, C), bias.reshape(1, C)

    s1, b1 = frozen_bn(ks[3], ks[4], ks[5], ks[6], planes)
    s2, b2 = frozen_bn(ks[7], ks[8], ks[9], ks[10], planes)
    s3, b3 = frozen_bn(ks[11], ks[12], ks[13], ks[14], planes * exp)

    return (w1, s1, b1, w2, s2, b2, w3, s3, b3)


def reference_forward(x_nchw, params, *, dilation=1):
    """Pure-JAX reference (lax convs) matching the PyTorch forward."""
    (w1, s1, b1, w2, s2, b2, w3, s3, b3) = params
    dn = ("NHWC", "HWIO", "NHWC")
    x = jnp.transpose(x_nchw, (0, 2, 3, 1))

    h = jax.lax.conv_general_dilated(
        x, w1.reshape(1, 1, *w1.shape), (1, 1), "VALID", dimension_numbers=dn)
    h = jnp.maximum(h * s1 + b1, 0.0)

    h = jax.lax.conv_general_dilated(
        h, w2, (1, 1), [(dilation, dilation), (dilation, dilation)],
        rhs_dilation=(dilation, dilation), dimension_numbers=dn)
    h = jnp.maximum(h * s2 + b2, 0.0)

    h = jax.lax.conv_general_dilated(
        h, w3.reshape(1, 1, *w3.shape), (1, 1), "VALID", dimension_numbers=dn)
    h = h * s3 + b3

    out = jnp.maximum(h + x, 0.0)
    return jnp.transpose(out, (0, 3, 1, 2))


# ----------------------------------------------------------------------------- main


if __name__ == "__main__":
    inplanes, planes = 16, 4          # inplanes == planes * expansion (downsample=None)
    N, H, W = 2, 16, 16

    key = jax.random.PRNGKey(0)
    kx, kp = jax.random.split(key)
    x = jax.random.normal(kx, (N, inplanes, H, W), jnp.float32)
    params = init_params(kp, inplanes, planes)

    # f32 path: exercise the row-tiled (halo'd) pipeline at dilation 1 and 2.
    for dil in (1, 2):
        out = jax.block_until_ready(
            bottleneck_forward(x, params, dilation=dil, row_tile=8))
        ref = jax.block_until_ready(reference_forward(x, params, dilation=dil))
        assert out.shape == (N, inplanes, H, W)
        err = float(jnp.max(jnp.abs(out - ref)))
        assert jnp.allclose(out, ref, rtol=1e-4, atol=1e-4), (dil, err)

    # bf16 MXU operands with f32 accumulation: loose tolerance check.
    out_bf16 = jax.block_until_ready(
        bottleneck_forward(x, params, dilation=1, row_tile=8,
                           compute_dtype=jnp.bfloat16))
    ref = reference_forward(x, params, dilation=1)
    assert float(jnp.max(jnp.abs(out_bf16 - ref))) < 0.25

    print("KERNEL_OK")
</pallas_src>

<mosaic_0001>
module attributes {stable_mosaic.version = 11 : i64} {
  func.func @_bottleneck_kernel(%arg0: i32, %arg1: i32, %arg2: memref<1x1x10x16x16xf32, #tpu.memory_space<vmem>>, %arg3: memref<16x4xf32, #tpu.memory_space<vmem>>, %arg4: memref<1x4xf32, #tpu.memory_space<vmem>>, %arg5: memref<3x12x4xf32, #tpu.memory_space<vmem>>, %arg6: memref<1x4xf32, #tpu.memory_space<vmem>>, %arg7: memref<4x16xf32, #tpu.memory_space<vmem>>, %arg8: memref<1x16xf32, #tpu.memory_space<vmem>>, %arg9: memref<1x1x8x16x16xf32, #tpu.memory_space<vmem>>, %arg10: memref<10x16x4xf32, #tpu.memory_space<vmem>>) attributes {dimension_semantics = [#tpu.dimension_semantics<parallel>, #tpu.dimension_semantics<parallel>], iteration_bounds = array<i64: 2, 2>, scalar_prefetch = 0 : i64, scratch_operands = 1 : i64, tpu.core_type = #tpu.core_type<tc>, window_params = [{transform_indices = @transform_0, window_bounds = array<i64: 1, 1, 10, 16, 16>}, {pipeline_mode = #tpu.pipeline_mode<synchronous>, transform_indices = @transform_1, window_bounds = array<i64: 16, 4>}, {pipeline_mode = #tpu.pipeline_mode<synchronous>, transform_indices = @transform_2, window_bounds = array<i64: 1, 4>}, {pipeline_mode = #tpu.pipeline_mode<synchronous>, transform_indices = @transform_3, window_bounds = array<i64: 3, 12, 4>}, {pipeline_mode = #tpu.pipeline_mode<synchronous>, transform_indices = @transform_4, window_bounds = array<i64: 1, 4>}, {pipeline_mode = #tpu.pipeline_mode<synchronous>, transform_indices = @transform_5, window_bounds = array<i64: 4, 16>}, {pipeline_mode = #tpu.pipeline_mode<synchronous>, transform_indices = @transform_6, window_bounds = array<i64: 1, 16>}, {transform_indices = @transform_7, window_bounds = array<i64: 1, 1, 8, 16, 16>}]} {
    %c0 = arith.constant 0 : index
    %c0_0 = arith.constant 0 : index
    %c0_1 = arith.constant 0 : index
    %c0_2 = arith.constant 0 : index
    %c0_3 = arith.constant 0 : index
    %0 = vector.load %arg2[%c0, %c0_0, %c0_1, %c0_2, %c0_3] : memref<1x1x10x16x16xf32, #tpu.memory_space<vmem>>, vector<1x1x10x16x16xf32>
    %1 = vector.shape_cast %0 : vector<1x1x10x16x16xf32> to vector<10x16x16xf32>
    %2 = vector.shape_cast %1 : vector<10x16x16xf32> to vector<160x16xf32>
    %c0_4 = arith.constant 0 : index
    %c0_5 = arith.constant 0 : index
    %3 = vector.load %arg3[%c0_4, %c0_5] : memref<16x4xf32, #tpu.memory_space<vmem>>, vector<16x4xf32>
    %cst = arith.constant dense<0.000000e+00> : vector<160x4xf32>
    %4 = tpu.matmul %2, %3, %cst {dimension_numbers = #tpu.dot_dimension_numbers<[1], [0], [0], [1], [0, 0, 1, 1], [], []>} : vector<160x16xf32>, vector<16x4xf32>, vector<160x4xf32> -> vector<160x4xf32>
    %c0_6 = arith.constant 0 : index
    %c0_7 = arith.constant 0 : index
    %5 = vector.load %arg4[%c0_6, %c0_7] : memref<1x4xf32, #tpu.memory_space<vmem>>, vector<1x4xf32>
    %6 = vector.broadcast %5 : vector<1x4xf32> to vector<160x4xf32>
    %7 = arith.addf %4, %6 : vector<160x4xf32>
    %cst_8 = arith.constant 0.000000e+00 : f32
    %8 = vector.broadcast %cst_8 : f32 to vector<160x4xf32>
    %9 = arith.maximumf %7, %8 : vector<160x4xf32>
    %10 = vector.shape_cast %9 : vector<160x4xf32> to vector<10x16x4xf32>
    %c0_9 = arith.constant 0 : index
    %c0_10 = arith.constant 0 : index
    %c0_11 = arith.constant 0 : index
    %11 = vector.load %arg10[%c0_9, %c0_10, %c0_11] : memref<10x16x4xf32, #tpu.memory_space<vmem>>, vector<10x16x4xf32>
    tpu.vector_store %arg10[%c0_9, %c0_10, %c0_11], %10 {strides = array<i32>} : memref<10x16x4xf32, #tpu.memory_space<vmem>>, vector<10x16x4xf32>,
    %c0_i32 = arith.constant 0 : i32
    %12 = arith.cmpi eq, %arg1, %c0_i32 : i32
    %13 = arith.extui %12 : i1 to i32
    %c0_i32_12 = arith.constant 0 : i32
    %14 = arith.cmpi ne, %13, %c0_i32_12 : i32
    scf.if %14 {
      %cst_48 = arith.constant 0.000000e+00 : f32
      %64 = vector.broadcast %cst_48 : f32 to vector<1x16x4xf32>
      %c0_49 = arith.constant 0 : index
      %c0_50 = arith.constant 0 : index
      %c0_51 = arith.constant 0 : index
      %65 = vector.load %arg10[%c0_49, %c0_50, %c0_51] : memref<10x16x4xf32, #tpu.memory_space<vmem>>, vector<1x16x4xf32>
      tpu.vector_store %arg10[%c0_49, %c0_50, %c0_51], %64 {strides = array<i32>} : memref<10x16x4xf32, #tpu.memory_space<vmem>>, vector<1x16x4xf32>,
    } else {
    }
    %c1_i32 = arith.constant 1 : i32
    %15 = arith.cmpi eq, %arg1, %c1_i32 : i32
    %16 = arith.extui %15 : i1 to i32
    %c0_i32_13 = arith.constant 0 : i32
    %17 = arith.cmpi ne, %16, %c0_i32_13 : i32
    scf.if %17 {
      %cst_48 = arith.constant 0.000000e+00 : f32
      %64 = vector.broadcast %cst_48 : f32 to vector<1x16x4xf32>
      %c9 = arith.constant 9 : index
      %c0_49 = arith.constant 0 : index
      %c0_50 = arith.constant 0 : index
      %65 = vector.load %arg10[%c9, %c0_49, %c0_50] : memref<10x16x4xf32, #tpu.memory_space<vmem>>, vector<1x16x4xf32>
      tpu.vector_store %arg10[%c9, %c0_49, %c0_50], %64 {strides = array<i32>} : memref<10x16x4xf32, #tpu.memory_space<vmem>>, vector<1x16x4xf32>,
    } else {
    }
    %c0_14 = arith.constant 0 : index
    %c0_15 = arith.constant 0 : index
    %c0_16 = arith.constant 0 : index
    %18 = vector.load %arg10[%c0_14, %c0_15, %c0_16] : memref<10x16x4xf32, #tpu.memory_space<vmem>>, vector<10x16x4xf32>
    %cst_17 = arith.constant 0.000000e+00 : f32
    %19 = vector.broadcast %cst_17 : f32 to vector<10x1x4xf32>
    %20 = vector.extract_strided_slice %18 {offsets = [0, 0, 0], sizes = [10, 15, 4], strides = [1, 1, 1]} : vector<10x16x4xf32> to vector<10x15x4xf32>
    %21 = tpu.concatenate %19, %20 in 1 : vector<10x1x4xf32>, vector<10x15x4xf32> -> vector<10x16x4xf32>
    %22 = vector.extract_strided_slice %18 {offsets = [0, 1, 0], sizes = [10, 15, 4], strides = [1, 1, 1]} : vector<10x16x4xf32> to vector<10x15x4xf32>
    %23 = tpu.concatenate %22, %19 in 1 : vector<10x15x4xf32>, vector<10x1x4xf32> -> vector<10x16x4xf32>
    %24 = tpu.concatenate %21, %18, %23 in 2 : vector<10x16x4xf32>, vector<10x16x4xf32>, vector<10x16x4xf32> -> vector<10x16x12xf32>
    %cst_18 = arith.constant 0.000000e+00 : f32
    %25 = vector.broadcast %cst_18 : f32 to vector<128x4xf32>
    %26 = vector.extract_strided_slice %24 {offsets = [0, 0, 0], sizes = [8, 16, 12], strides = [1, 1, 1]} : vector<10x16x12xf32> to vector<8x16x12xf32>
    %27 = vector.shape_cast %26 : vector<8x16x12xf32> to vector<128x12xf32>
    %c0_19 = arith.constant 0 : index
    %c0_20 = arith.constant 0 : index
    %c0_21 = arith.constant 0 : index
    %28 = vector.load %arg5[%c0_19, %c0_20, %c0_21] : memref<3x12x4xf32, #tpu.memory_space<vmem>>, vector<1x12x4xf32>
    %29 = vector.shape_cast %28 : vector<1x12x4xf32> to vector<12x4xf32>
    %cst_22 = arith.constant dense<0.000000e+00> : vector<128x4xf32>
    %30 = tpu.matmul %27, %29, %cst_22 {dimension_numbers = #tpu.dot_dimension_numbers<[1], [0], [0], [1], [0, 0, 1, 1], [], []>} : vector<128x12xf32>, vector<12x4xf32>, vector<128x4xf32> -> vector<128x4xf32>
    %31 = arith.addf %25, %30 : vector<128x4xf32>
    %32 = vector.extract_strided_slice %24 {offsets = [1, 0, 0], sizes = [8, 16, 12], strides = [1, 1, 1]} : vector<10x16x12xf32> to vector<8x16x12xf32>
    %33 = vector.shape_cast %32 : vector<8x16x12xf32> to vector<128x12xf32>
    %c1 = arith.constant 1 : index
    %c0_23 = arith.constant 0 : index
    %c0_24 = arith.constant 0 : index
    %34 = vector.load %arg5[%c1, %c0_23, %c0_24] : memref<3x12x4xf32, #tpu.memory_space<vmem>>, vector<1x12x4xf32>
    %35 = vector.shape_cast %34 : vector<1x12x4xf32> to vector<12x4xf32>
    %cst_25 = arith.constant dense<0.000000e+00> : vector<128x4xf32>
    %36 = tpu.matmul %33, %35, %cst_25 {dimension_numbers = #tpu.dot_dimension_numbers<[1], [0], [0], [1], [0, 0, 1, 1], [], []>} : vector<128x12xf32>, vector<12x4xf32>, vector<128x4xf32> -> vector<128x4xf32>
    %37 = arith.addf %31, %36 : vector<128x4xf32>
    %38 = vector.extract_strided_slice %24 {offsets = [2, 0, 0], sizes = [8, 16, 12], strides = [1, 1, 1]} : vector<10x16x12xf32> to vector<8x16x12xf32>
    %39 = vector.shape_cast %38 : vector<8x16x12xf32> to vector<128x12xf32>
    %c2 = arith.constant 2 : index
    %c0_26 = arith.constant 0 : index
    %c0_27 = arith.constant 0 : index
    %40 = vector.load %arg5[%c2, %c0_26, %c0_27] : memref<3x12x4xf32, #tpu.memory_space<vmem>>, vector<1x12x4xf32>
    %41 = vector.shape_cast %40 : vector<1x12x4xf32> to vector<12x4xf32>
    %cst_28 = arith.constant dense<0.000000e+00> : vector<128x4xf32>
    %42 = tpu.matmul %39, %41, %cst_28 {dimension_numbers = #tpu.dot_dimension_numbers<[1], [0], [0], [1], [0, 0, 1, 1], [], []>} : vector<128x12xf32>, vector<12x4xf32>, vector<128x4xf32> -> vector<128x4xf32>
    %43 = arith.addf %37, %42 : vector<128x4xf32>
    %c0_29 = arith.constant 0 : index
    %c0_30 = arith.constant 0 : index
    %44 = vector.load %arg6[%c0_29, %c0_30] : memref<1x4xf32, #tpu.memory_space<vmem>>, vector<1x4xf32>
    %45 = vector.broadcast %44 : vector<1x4xf32> to vector<128x4xf32>
    %46 = arith.addf %43, %45 : vector<128x4xf32>
    %cst_31 = arith.constant 0.000000e+00 : f32
    %47 = vector.broadcast %cst_31 : f32 to vector<128x4xf32>
    %48 = arith.maximumf %46, %47 : vector<128x4xf32>
    %c0_32 = arith.constant 0 : index
    %c0_33 = arith.constant 0 : index
    %49 = vector.load %arg7[%c0_32, %c0_33] : memref<4x16xf32, #tpu.memory_space<vmem>>, vector<4x16xf32>
    %cst_34 = arith.constant dense<0.000000e+00> : vector<128x16xf32>
    %50 = tpu.matmul %48, %49, %cst_34 {dimension_numbers = #tpu.dot_dimension_numbers<[1], [0], [0], [1], [0, 0, 1, 1], [], []>} : vector<128x4xf32>, vector<4x16xf32>, vector<128x16xf32> -> vector<128x16xf32>
    %c0_35 = arith.constant 0 : index
    %c0_36 = arith.constant 0 : index
    %c1_37 = arith.constant 1 : index
    %c0_38 = arith.constant 0 : index
    %c0_39 = arith.constant 0 : index
    %51 = vector.load %arg2[%c0_35, %c0_36, %c1_37, %c0_38, %c0_39] : memref<1x1x10x16x16xf32, #tpu.memory_space<vmem>>, vector<1x1x8x16x16xf32>
    %52 = vector.shape_cast %51 : vector<1x1x8x16x16xf32> to vector<8x16x16xf32>
    %53 = vector.shape_cast %52 : vector<8x16x16xf32> to vector<128x16xf32>
    %c0_40 = arith.constant 0 : index
    %c0_41 = arith.constant 0 : index
    %54 = vector.load %arg8[%c0_40, %c0_41] : memref<1x16xf32, #tpu.memory_space<vmem>>, vector<1x16xf32>
    %55 = vector.broadcast %54 : vector<1x16xf32> to vector<128x16xf32>
    %56 = arith.addf %50, %55 : vector<128x16xf32>
    %57 = arith.addf %56, %53 : vector<128x16xf32>
    %cst_42 = arith.constant 0.000000e+00 : f32
    %58 = vector.broadcast %cst_42 : f32 to vector<128x16xf32>
    %59 = arith.maximumf %57, %58 : vector<128x16xf32>
    %60 = vector.shape_cast %59 : vector<128x16xf32> to vector<8x16x16xf32>
    %c0_43 = arith.constant 0 : index
    %c0_44 = arith.constant 0 : index
    %c0_45 = arith.constant 0 : index
    %c0_46 = arith.constant 0 : index
    %c0_47 = arith.constant 0 : index
    %61 = vector.load %arg9[%c0_43, %c0_44, %c0_45, %c0_46, %c0_47] : memref<1x1x8x16x16xf32, #tpu.memory_space<vmem>>, vector<1x1x8x16x16xf32>
    %62 = vector.shape_cast %61 : vector<1x1x8x16x16xf32> to vector<8x16x16xf32>
    %63 = vector.shape_cast %60 : vector<8x16x16xf32> to vector<1x1x8x16x16xf32>
    tpu.vector_store %arg9[%c0_43, %c0_44, %c0_45, %c0_46, %c0_47], %63 {strides = array<i32>} : memref<1x1x8x16x16xf32, #tpu.memory_space<vmem>>, vector<1x1x8x16x16xf32>,
    return
  }
  func.func @transform_0(%arg0: i32, %arg1: i32) -> (i32, i32, i32, i32, i32) {
    %c0_i32 = arith.constant 0 : i32
    %c0_i32_0 = arith.constant 0 : i32
    %c0_i32_1 = arith.constant 0 : i32
    %c0_i32_2 = arith.constant 0 : i32
    return %arg0, %arg1, %c0_i32, %c0_i32_0, %c0_i32_1 : i32, i32, i32, i32, i32
  }
  func.func @transform_1(%arg0: i32, %arg1: i32) -> (i32, i32) {
    %c0_i32 = arith.constant 0 : i32
    %c0_i32_0 = arith.constant 0 : i32
    %c0_i32_1 = arith.constant 0 : i32
    return %c0_i32, %c0_i32_0 : i32, i32
  }
  func.func @transform_2(%arg0: i32, %arg1: i32) -> (i32, i32) {
    %c0_i32 = arith.constant 0 : i32
    %c0_i32_0 = arith.constant 0 : i32
    %c0_i32_1 = arith.constant 0 : i32
    return %c0_i32, %c0_i32_0 : i32, i32
  }
  func.func @transform_3(%arg0: i32, %arg1: i32) -> (i32, i32, i32) {
    %c0_i32 = arith.constant 0 : i32
    %c0_i32_0 = arith.constant 0 : i32
    %c0_i32_1 = arith.constant 0 : i32
    %c0_i32_2 = arith.constant 0 : i32
    return %c0_i32, %c0_i32_0, %c0_i32_1 : i32, i32, i32
  }
  func.func @transform_4(%arg0: i32, %arg1: i32) -> (i32, i32) {
    %c0_i32 = arith.constant 0 : i32
    %c0_i32_0 = arith.constant 0 : i32
    %c0_i32_1 = arith.constant 0 : i32
    return %c0_i32, %c0_i32_0 : i32, i32
  }
  func.func @transform_5(%arg0: i32, %arg1: i32) -> (i32, i32) {
    %c0_i32 = arith.constant 0 : i32
    %c0_i32_0 = arith.constant 0 : i32
    %c0_i32_1 = arith.constant 0 : i32
    return %c0_i32, %c0_i32_0 : i32, i32
  }
  func.func @transform_6(%arg0: i32, %arg1: i32) -> (i32, i32) {
    %c0_i32 = arith.constant 0 : i32
    %c0_i32_0 = arith.constant 0 : i32
    %c0_i32_1 = arith.constant 0 : i32
    return %c0_i32, %c0_i32_0 : i32, i32
  }
  func.func @transform_7(%arg0: i32, %arg1: i32) -> (i32, i32, i32, i32, i32) {
    %c0_i32 = arith.constant 0 : i32
    %c0_i32_0 = arith.constant 0 : i32
    %c0_i32_1 = arith.constant 0 : i32
    %c0_i32_2 = arith.constant 0 : i32
    return %arg0, %arg1, %c0_i32, %c0_i32_0, %c0_i32_1 : i32, i32, i32, i32, i32
  }
}

</mosaic_0001>

<llo_original>
// kernel: bottleneck_forward.1
$region0: #{bottleneck_forward.1}
  #allocation0 [shape = 'u32[]', space=smem, size = 0x4, offset = 0x4, fixed_abs, tag = 'smem constant byte address 0x4 - core index']
  #allocation1 [shape = 'u32[144,128]{1,0:T(1,128)}', space=vmem, size = 0x12000, scoped, tag = 'internal scratch']
  #allocation2 [shape = 'f32[10,16,4]{2,1,0:T(8,128)}', space=vmem, size = 0x14000, scoped, tag = 'scratch operand']
  %s0 = inlined_call_operand.vmem [shape: f32[2,2,10,16,16], index: 0, kind: input, shape index: {}]
  %s1 = inlined_call_operand.vmem [shape: f32[16,4], index: 1, kind: input, shape index: {}]
  %s2 = inlined_call_operand.vmem [shape: f32[1,4], index: 2, kind: input, shape index: {}]
  %s3 = inlined_call_operand.vmem [shape: f32[3,12,4], index: 3, kind: input, shape index: {}]
  %s4 = inlined_call_operand.vmem [shape: f32[1,4], index: 4, kind: input, shape index: {}]
  %s5 = inlined_call_operand.vmem [shape: f32[4,16], index: 5, kind: input, shape index: {}]
  %s6 = inlined_call_operand.vmem [shape: f32[1,16], index: 6, kind: input, shape index: {}]
  %s7 = inlined_call_operand.vmem [shape: f32[2,2,8,16,16], index: 7, kind: output, shape index: {}]
  %s8 = sld [smem:[#allocation0]]
  $region69: #{bottleneck_forward.1} parent=0
    _
  %s10 = ssub.s32 1, %s8
  %s11 = scalar_select 0, %s10, %s8
  loop: start=0, step=1, limit=6
  $region2: #{bottleneck_forward.1} parent=0 // loop_pre_header
    _
  $region3: #{bottleneck_forward.1} parent=0 // loop_header
    %s13 = sphi 0, %s17
    %p14 = scmp.ge.s32.totalorder %s13, 6
    %s20 = sphi 0, %s32
    %s21 = sphi 0, %s28
    %s22 = sphi 0, %s20
    %s23 = sphi 0, %s21
    %s24 = sphi 0, %s22
    %s25 = sphi 0, %s23
    %s37 = sphi 0, %s39
    %s40 = sphi 0, %s37
    %s41 = sphi 0, %s40
    %s57 = sphi 0, %s41
    %s61 = sphi 0, %s61
    %s63 = sphi 0, %s61
    %s64 = sphi 0, %s63
    %s78 = sphi 0, %s64
    %s82 = sphi 0, %s82
    %s84 = sphi 0, %s82
    %s85 = sphi 0, %s84
    %s99 = sphi 0, %s85
    %s103 = sphi 0, %s103
    %s105 = sphi 0, %s103
    %s106 = sphi 0, %s105
    %s120 = sphi 0, %s106
    %s124 = sphi 0, %s124
    %s126 = sphi 0, %s124
    %s127 = sphi 0, %s126
    %s141 = sphi 0, %s127
    %s145 = sphi 0, %s145
    %s147 = sphi 0, %s145
    %s148 = sphi 0, %s147
    %s162 = sphi 0, %s148
    %s166 = sphi 0, %s166
    %s168 = sphi 0, %s166
    %s169 = sphi 0, %s168
    %s183 = sphi 0, %s169
    %s191 = sphi 0, %s193
    %s194 = sphi 0, %s191
    %s195 = sphi 0, %s194
    %s211 = sphi 0, %s195
  $region4: #{bottleneck_forward.1} parent=0 // loop_header_branch
    %16 = sbr.rel (%p14) target = $region8
  $region5: #{bottleneck_forward.1} parent=0 // loop_body
    %s18 = ssub.s32 %s13, 1
    %s19 = ssub.s32 %s13, 2
    %s26 = sadd.s32 1, %s21
    %p27 = scmp.ge.s32.totalorder %s26, 2
    %s28 = scalar_select %p27, 0, %s26
    %s29 = sadd.s32 1, %s20
    %s30 = scalar_select %p27, %s29, %s20
    %p31 = scmp.ge.s32.totalorder %s30, 2
    %s32 = scalar_select %p31, 0, %s30
    %s33 = ssub.s32 %s20, %s32
    %s34 = ssub.s32 %s21, %s28
    %s35 = sor.u32 %s33, %s34
    %p36 = scmp.eq.s32.totalorder %s35, 0
    %s38 = sadd.s32 %s37, 1
    %s39 = scalar_select %p36, %s37, %s38
    %p42 = pneg %p36
    %p43 = scmp.eq.s32.totalorder %s13, 3
    %p44 = por %p42, %p43
    %p45 = scmp.ne.s32.totalorder %s37, %s40
    %p46 = scmp.eq.s32.totalorder %s13, 0
    %p47 = por %p45, %p46
    %p48 = scmp.ne.s32.totalorder %s37, %s40
    %p49 = scmp.eq.s32.totalorder %s18, 3
    %p50 = por %p48, %p49
    %p51 = scmp.ne.s32.totalorder %s40, %s41
    %p52 = scmp.eq.s32.totalorder %s18, 0
    %p53 = por %p51, %p52
    %p54 = scmp.ne.s32.totalorder %s40, %s41
    %p55 = scmp.eq.s32.totalorder %s19, 3
    %p56 = por %p54, %p55
    %p58 = scmp.ne.s32.totalorder %s41, %s57
    %p59 = scmp.eq.s32.totalorder %s19, 0
    %p60 = por %p58, %p59
    %s62 = sadd.s32 %s61, 1
    %p65 = scmp.eq.s32.totalorder %s13, 3
    %p66 = scmp.ne.s32.totalorder %s61, %s63
    %p67 = scmp.eq.s32.totalorder %s13, 0
    %p68 = por %p66, %p67
    %p69 = scmp.ne.s32.totalorder %s61, %s63
    %p70 = scmp.eq.s32.totalorder %s18, 3
    %p71 = por %p69, %p70
    %p72 = scmp.ne.s32.totalorder %s63, %s64
    %p73 = scmp.eq.s32.totalorder %s18, 0
    %p74 = por %p72, %p73
    %p75 = scmp.ne.s32.totalorder %s63, %s64
    %p76 = scmp.eq.s32.totalorder %s19, 3
    %p77 = por %p75, %p76
    %p79 = scmp.ne.s32.totalorder %s64, %s78
    %p80 = scmp.eq.s32.totalorder %s19, 0
    %p81 = por %p79, %p80
    %s83 = sadd.s32 %s82, 1
    %p86 = scmp.eq.s32.totalorder %s13, 3
    %p87 = scmp.ne.s32.totalorder %s82, %s84
    %p88 = scmp.eq.s32.totalorder %s13, 0
    %p89 = por %p87, %p88
    %p90 = scmp.ne.s32.totalorder %s82, %s84
    %p91 = scmp.eq.s32.totalorder %s18, 3
    %p92 = por %p90, %p91
    %p93 = scmp.ne.s32.totalorder %s84, %s85
    %p94 = scmp.eq.s32.totalorder %s18, 0
    %p95 = por %p93, %p94
    %p96 = scmp.ne.s32.totalorder %s84, %s85
    %p97 = scmp.eq.s32.totalorder %s19, 3
    %p98 = por %p96, %p97
    %p100 = scmp.ne.s32.totalorder %s85, %s99
    %p101 = scmp.eq.s32.totalorder %s19, 0
    %p102 = por %p100, %p101
    %s104 = sadd.s32 %s103, 1
    %p107 = scmp.eq.s32.totalorder %s13, 3
    %p108 = scmp.ne.s32.totalorder %s103, %s105
    %p109 = scmp.eq.s32.totalorder %s13, 0
    %p110 = por %p108, %p109
    %p111 = scmp.ne.s32.totalorder %s103, %s105
    %p112 = scmp.eq.s32.totalorder %s18, 3
    %p113 = por %p111, %p112
    %p114 = scmp.ne.s32.totalorder %s105, %s106
    %p115 = scmp.eq.s32.totalorder %s18, 0
    %p116 = por %p114, %p115
    %p117 = scmp.ne.s32.totalorder %s105, %s106
    %p118 = scmp.eq.s32.totalorder %s19, 3
    %p119 = por %p117, %p118
    %p121 = scmp.ne.s32.totalorder %s106, %s120
    %p122 = scmp.eq.s32.totalorder %s19, 0
    %p123 = por %p121, %p122
    %s125 = sadd.s32 %s124, 1
    %p128 = scmp.eq.s32.totalorder %s13, 3
    %p129 = scmp.ne.s32.totalorder %s124, %s126
    %p130 = scmp.eq.s32.totalorder %s13, 0
    %p131 = por %p129, %p130
    %p132 = scmp.ne.s32.totalorder %s124, %s126
    %p133 = scmp.eq.s32.totalorder %s18, 3
    %p134 = por %p132, %p133
    %p135 = scmp.ne.s32.totalorder %s126, %s127
    %p136 = scmp.eq.s32.totalorder %s18, 0
    %p137 = por %p135, %p136
    %p138 = scmp.ne.s32.totalorder %s126, %s127
    %p139 = scmp.eq.s32.totalorder %s19, 3
    %p140 = por %p138, %p139
    %p142 = scmp.ne.s32.totalorder %s127, %s141
    %p143 = scmp.eq.s32.totalorder %s19, 0
    %p144 = por %p142, %p143
    %s146 = sadd.s32 %s145, 1
    %p149 = scmp.eq.s32.totalorder %s13, 3
    %p150 = scmp.ne.s32.totalorder %s145, %s147
    %p151 = scmp.eq.s32.totalorder %s13, 0
    %p152 = por %p150, %p151
    %p153 = scmp.ne.s32.totalorder %s145, %s147
    %p154 = scmp.eq.s32.totalorder %s18, 3
    %p155 = por %p153, %p154
    %p156 = scmp.ne.s32.totalorder %s147, %s148
    %p157 = scmp.eq.s32.totalorder %s18, 0
    %p158 = por %p156, %p157
    %p159 = scmp.ne.s32.totalorder %s147, %s148
    %p160 = scmp.eq.s32.totalorder %s19, 3
    %p161 = por %p159, %p160
    %p163 = scmp.ne.s32.totalorder %s148, %s162
    %p164 = scmp.eq.s32.totalorder %s19, 0
    %p165 = por %p163, %p164
    %s167 = sadd.s32 %s166, 1
    %p170 = scmp.eq.s32.totalorder %s13, 3
    %p171 = scmp.ne.s32.totalorder %s166, %s168
    %p172 = scmp.eq.s32.totalorder %s13, 0
    %p173 = por %p171, %p172
    %p174 = scmp.ne.s32.totalorder %s166, %s168
    %p175 = scmp.eq.s32.totalorder %s18, 3
    %p176 = por %p174, %p175
    %p177 = scmp.ne.s32.totalorder %s168, %s169
    %p178 = scmp.eq.s32.totalorder %s18, 0
    %p179 = por %p177, %p178
    %p180 = scmp.ne.s32.totalorder %s168, %s169
    %p181 = scmp.eq.s32.totalorder %s19, 3
    %p182 = por %p180, %p181
    %p184 = scmp.ne.s32.totalorder %s169, %s183
    %p185 = scmp.eq.s32.totalorder %s19, 0
    %p186 = por %p184, %p185
    %s187 = ssub.s32 %s20, %s32
    %s188 = ssub.s32 %s21, %s28
    %s189 = sor.u32 %s187, %s188
    %p190 = scmp.eq.s32.totalorder %s189, 0
    %s192 = sadd.s32 %s191, 1
    %s193 = scalar_select %p190, %s191, %s192
    %p196 = pneg %p190
    %p197 = scmp.eq.s32.totalorder %s13, 3
    %p198 = por %p196, %p197
    %p199 = scmp.ne.s32.totalorder %s191, %s194
    %p200 = scmp.eq.s32.totalorder %s13, 0
    %p201 = por %p199, %p200
    %p202 = scmp.ne.s32.totalorder %s191, %s194
    %p203 = scmp.eq.s32.totalorder %s18, 3
    %p204 = por %p202, %p203
    %p205 = scmp.ne.s32.totalorder %s194, %s195
    %p206 = scmp.eq.s32.totalorder %s18, 0
    %p207 = por %p205, %p206
    %p208 = scmp.ne.s32.totalorder %s194, %s195
    %p209 = scmp.eq.s32.totalorder %s19, 3
    %p210 = por %p208, %p209
    %p212 = scmp.ne.s32.totalorder %s195, %s211
    %p213 = scmp.eq.s32.totalorder %s19, 0
    %p214 = por %p212, %p213
    %p215 = scmp.le.s32.totalorder 1, %s13
    %p216 = scmp.lt.s32.totalorder %s13, 5
    %p217 = pnand %p215, %p216
    %p218 = pneg %p217
    // Predicated region
    $region9: #{bottleneck_forward.1} parent=5 // pred_check
      _
    $region10: #{bottleneck_forward.1} parent=5 // pred_check_branch
      %220 = sbr.rel (%p217) target = $region12
    $region11: #{bottleneck_forward.1} parent=5 // pred_region
      %s221 = ssub.s32 %s13, 1
      // Predicated region
      $region13: #{bottleneck_forward.1} parent=11 // pred_check
        %p222 = pneg %p74
      $region14: #{bottleneck_forward.1} parent=11 // pred_check_branch
        %224 = sbr.rel (%p222) target = $region16
      $region15: #{bottleneck_forward.1} parent=11 // pred_region
        _
      $region16: #{bottleneck_forward.1} parent=11 // pred_fallthru
        _
      // Predicated region
      $region17: #{bottleneck_forward.1} parent=11 // pred_check
        %p225 = pneg %p95
      $region18: #{bottleneck_forward.1} parent=11 // pred_check_branch
        %227 = sbr.rel (%p225) target = $region20
      $region19: #{bottleneck_forward.1} parent=11 // pred_region
        _
      $region20: #{bottleneck_forward.1} parent=11 // pred_fallthru
        _
      // Predicated region
      $region21: #{bottleneck_forward.1} parent=11 // pred_check
        %p228 = pneg %p116
      $region22: #{bottleneck_forward.1} parent=11 // pred_check_branch
        %230 = sbr.rel (%p228) target = $region24
      $region23: #{bottleneck_forward.1} parent=11 // pred_region
        _
      $region24: #{bottleneck_forward.1} parent=11 // pred_fallthru
        _
      // Predicated region
      $region25: #{bottleneck_forward.1} parent=11 // pred_check
        %p231 = pneg %p137
      $region26: #{bottleneck_forward.1} parent=11 // pred_check_branch
        %233 = sbr.rel (%p231) target = $region28
      $region27: #{bottleneck_forward.1} parent=11 // pred_region
        _
      $region28: #{bottleneck_forward.1} parent=11 // pred_fallthru
        _
      // Predicated region
      $region29: #{bottleneck_forward.1} parent=11 // pred_check
        %p234 = pneg %p158
      $region30: #{bottleneck_forward.1} parent=11 // pred_check_branch
        %236 = sbr.rel (%p234) target = $region32
      $region31: #{bottleneck_forward.1} parent=11 // pred_region
        _
      $region32: #{bottleneck_forward.1} parent=11 // pred_fallthru
        _
      // Predicated region
      $region33: #{bottleneck_forward.1} parent=11 // pred_check
        %p237 = pneg %p179
      $region34: #{bottleneck_forward.1} parent=11 // pred_check_branch
        %239 = sbr.rel (%p237) target = $region36
      $region35: #{bottleneck_forward.1} parent=11 // pred_region
        _
      $region36: #{bottleneck_forward.1} parent=11 // pred_fallthru
        _
    $region12: #{bottleneck_forward.1} parent=5 // pred_fallthru
      _
    %p240 = scmp.lt.s32.totalorder %s13, 4
    // Predicated region
    $region37: #{bottleneck_forward.1} parent=5 // pred_check
      %p241 = pneg %p240
    $region38: #{bottleneck_forward.1} parent=5 // pred_check_branch
      %243 = sbr.rel (%p241) target = $region40
    $region39: #{bottleneck_forward.1} parent=5 // pred_region
      // Predicated region
      $region41: #{bottleneck_forward.1} parent=39 // pred_check
        %p244 = pneg %p47
      $region42: #{bottleneck_forward.1} parent=39 // pred_check_branch
        %246 = sbr.rel (%p244) target = $region44
      $region43: #{bottleneck_forward.1} parent=39 // pred_region
        %p247 = scmp.lt.s32.totalorder %s20, 1
        %s248 = scalar_select %p247, %s20, 1
        %p249 = scmp.lt.s32.totalorder %s21, 1
        %s250 = scalar_select %p249, %s21, 1
        %s251 = smul.addr %s250, 20
        %s252 = smul.addr %s248, 40
        %s253 = sadd.s32 %s251, %s252
        %s254 = smul.addr %s253, 8
        %s255 = scalar_lea.vmem %s0, %s254
      $region44: #{bottleneck_forward.1} parent=39 // pred_fallthru
        _
    $region40: #{bottleneck_forward.1} parent=5 // pred_fallthru
      _
    %p256 = scmp.le.s32.totalorder 1, %s13
    %p257 = scmp.lt.s32.totalorder %s13, 5
    %p258 = pnand %p256, %p257
    %p259 = pneg %p258
    // Predicated region
    $region45: #{bottleneck_forward.1} parent=5 // pred_check
      _
    $region46: #{bottleneck_forward.1} parent=5 // pred_check_branch
      %261 = sbr.rel (%p258) target = $region48
    $region47: #{bottleneck_forward.1} parent=5 // pred_region
      %s262 = ssub.s32 %s13, 1
      %p263 = scmp.lt.s32.totalorder %s22, 1
      %s264 = scalar_select %p263, %s22, 1
      %p265 = scmp.lt.s32.totalorder %s23, 1
      %s266 = scalar_select %p265, %s23, 1
      %s267 = smul.addr %s266, 20
      %s268 = smul.addr %s264, 40
      %s269 = sadd.s32 %s267, %s268
      %s270 = smul.addr %s269, 8
      %s271 = scalar_lea.vmem %s0, %s270
      %p272 = pneg %p53
      %p273 = pneg %p50
      %p274 = pneg %p74
      %p275 = pneg %p71
      %p276 = pneg %p95
      %p277 = pneg %p92
      %p278 = pneg %p116
      %p279 = pneg %p113
      %p280 = pneg %p137
      %p281 = pneg %p134
      %p282 = pneg %p158
      %p283 = pneg %p155
      %p284 = pneg %p179
      %p285 = pneg %p176
      %p286 = pneg %p207
      %p287 = pneg %p204
      %p288 = scmp.lt.s32.totalorder %s22, 1
      %s289 = scalar_select %p288, %s22, 1
      %p290 = scmp.lt.s32.totalorder %s23, 1
      %s291 = scalar_select %p290, %s23, 1
      %s292 = smul.addr %s291, 16
      %s293 = smul.addr %s289, 32
      %s294 = sadd.s32 %s292, %s293
      %s295 = smul.addr %s294, 8
      %s296 = scalar_lea.vmem %s7, %s295
      %p297 = scmp.lt.s32.totalorder %s22, 1
      %s298 = scalar_select %p297, %s22, 1
      %p299 = scmp.lt.s32.totalorder %s23, 1
      %s300 = scalar_select %p299, %s23, 1
      %s301 = smul.addr %s300, 20
      %s302 = smul.addr %s298, 40
      %s303 = sadd.s32 %s301, %s302
      %s304 = smul.addr %s303, 8
      %s305 = scalar_lea.vmem %s0, %s304
      %p306 = scmp.lt.s32.totalorder %s22, 1
      %s307 = scalar_select %p306, %s22, 1
      %p308 = scmp.lt.s32.totalorder %s23, 1
      %s309 = scalar_select %p308, %s23, 1
      %s310 = smul.addr %s309, 16
      %s311 = smul.addr %s307, 32
      %s312 = sadd.s32 %s310, %s311
      %s313 = smul.addr %s312, 8
      %s314 = scalar_lea.vmem %s7, %s313
      %v315 = vld [vmem:[%s305] sm:$0xff]
      %v316 = vld [vmem:[%s305 + $0x8] sm:$0xff]
      %v317 = vld [vmem:[%s305 + $0x10] sm:$0xff]
      %v318 = vld [vmem:[%s305 + $0x18] sm:$0xff]
      %v319 = vld [vmem:[%s305 + $0x20] sm:$0xff]
      %v320 = vld [vmem:[%s305 + $0x28] sm:$0xff]
      %v321 = vld [vmem:[%s305 + $0x30] sm:$0xff]
      %v322 = vld [vmem:[%s305 + $0x38] sm:$0xff]
      %v323 = vld [vmem:[%s305 + $0x40] sm:$0xff]
      %v324 = vld [vmem:[%s305 + $0x48] sm:$0xff]
      %v325 = vld [vmem:[%s305 + $0x50] sm:$0xff]
      %v326 = vld [vmem:[%s305 + $0x58] sm:$0xff]
      %v327 = vld [vmem:[%s305 + $0x60] sm:$0xff]
      %v328 = vld [vmem:[%s305 + $0x68] sm:$0xff]
      %v329 = vld [vmem:[%s305 + $0x70] sm:$0xff]
      %v330 = vld [vmem:[%s305 + $0x78] sm:$0xff]
      %v331 = vld [vmem:[%s305 + $0x80] sm:$0xff]
      %v332 = vld [vmem:[%s305 + $0x88] sm:$0xff]
      %v333 = vld [vmem:[%s305 + $0x90] sm:$0xff]
      %v334 = vld [vmem:[%s305 + $0x98] sm:$0xff]
      %v335 = vld [vmem:[%s1] sm:$0xff]
      %v336 = vld [vmem:[%s1 + $0x8] sm:$0xff]
      %v337 = vld [vmem:[%s2] sm:$0x1]
      %v339 = vlaneseq
      %v340 = vshrl.u32 %v339, 7
      %v341 = vsub.s32 0, %v340
      %v342 = vrot.slane %v337, %v341
      %vm344 = vcmask 130048
      %v346 = vsel %vm344, %v315, 0
      %v349 = vsel %vm344, %v316, 0
      %v352 = vsel %vm344, %v317, 0
      %v355 = vsel %vm344, %v318, 0
      %v358 = vsel %vm344, %v319, 0
      %v361 = vsel %vm344, %v320, 0
      %v364 = vsel %vm344, %v321, 0
      %v367 = vsel %vm344, %v322, 0
      %v370 = vsel %vm344, %v323, 0
      %v373 = vsel %vm344, %v324, 0
      %v376 = vsel %vm344, %v325, 0
      %v379 = vsel %vm344, %v326, 0
      %v382 = vsel %vm344, %v327, 0
      %v385 = vsel %vm344, %v328, 0
      %v388 = vsel %vm344, %v329, 0
      %v391 = vsel %vm344, %v330, 0
      %v394 = vsel %vm344, %v331, 0
      %v397 = vsel %vm344, %v332, 0
      %v400 = vsel %vm344, %v333, 0
      %v403 = vsel %vm344, %v334, 0
      %405 = vmatprep.subr.mxu0 0.0
      %406 = vmatpush1.msra.mxu0 %v335
      %407 = vmatprep.subr.mxu0 0.0
      %408 = vmatpush1.msra.mxu0 %v336
      %409 = vmatprep.subr.mxu0 0.0
      %410 = vmatpush1.msra.mxu0 0.0
      %411 = vmatprep.subr.mxu0 0.0
      %412 = vmatpush1.msra.mxu0 0.0
      %413 = vmatprep.subr.mxu0 0.0
      %414 = vmatpush1.msra.mxu0 0.0
      %415 = vmatprep.subr.mxu0 0.0
      %416 = vmatpush1.msra.mxu0 0.0
      %417 = vmatprep.subr.mxu0 0.0
      %418 = vmatpush1.msra.mxu0 0.0
      %419 = vmatprep.subr.mxu0 0.0
      %420 = vmatpush1.msra.mxu0 0.0
      %421 = vmatprep.subr.mxu0 0.0
      %422 = vmatpush1.msra.mxu0 0.0
      %423 = vmatprep.subr.mxu0 0.0
      %424 = vmatpush1.msra.mxu0 0.0
      %425 = vmatprep.subr.mxu0 0.0
      %426 = vmatpush1.msra.mxu0 0.0
      %427 = vmatprep.subr.mxu0 0.0
      %428 = vmatpush1.msra.mxu0 0.0
      %429 = vmatprep.subr.mxu0 0.0
      %430 = vmatpush1.msra.mxu0 0.0
      %431 = vmatprep.subr.mxu0 0.0
      %432 = vmatpush1.msra.mxu0 0.0
      %433 = vmatprep.subr.mxu0 0.0
      %434 = vmatpush1.msra.mxu0 0.0
      %435 = vmatprep.subr.mxu0 0.0
      %436 = vmatpush1.msra.mxu0 0.0
      %437 = vmatprep.subr.mxu0 0.0
      %438 = vmatpush1.msra.mxu0 0.0
      %439 = vmatprep.subr.mxu0 0.0
      %440 = vmatpush1.msra.mxu0 0.0
      %441 = vmatprep.subr.mxu0 0.0
      %442 = vmatpush1.msra.mxu0 0.0
      %443 = vmatprep.subr.mxu0 0.0
      %444 = vmatpush1.msra.mxu0 0.0
      %445 = vmatprep.subr.mxu0 0.0
      %446 = vmatpush1.msra.mxu0 0.0
      %447 = vmatprep.subr.mxu0 0.0
      %448 = vmatpush1.msra.mxu0 0.0
      %449 = vmatprep.subr.mxu0 0.0
      %450 = vmatpush1.msra.mxu0 0.0
      %451 = vmatprep.subr.mxu0 0.0
      %452 = vmatpush1.msra.mxu0 0.0
      %453 = vmatprep.subr.mxu0 0.0
      %454 = vmatpush1.msra.mxu0 0.0
      %455 = vmatprep.subr.mxu0 0.0
      %456 = vmatpush1.msra.mxu0 0.0
      %457 = vmatprep.subr.mxu0 0.0
      %458 = vmatpush1.msra.mxu0 0.0
      %459 = vmatprep.subr.mxu0 0.0
      %460 = vmatpush1.msra.mxu0 0.0
      %461 = vmatprep.subr.mxu0 0.0
      %462 = vmatpush1.msra.mxu0 0.0
      %463 = vmatprep.subr.mxu0 0.0
      %464 = vmatpush1.msra.mxu0 0.0
      %465 = vmatprep.subr.mxu0 0.0
      %466 = vmatpush1.msra.mxu0 0.0
      %467 = vmatprep.subr.mxu0 0.0
      %468 = vmatpush1.msra.mxu0 0.0
      %469 = vmatprep.mubr.f32.mxu0 0.0
      %470 = vmatmul.mubr.f32.gmra.mrb[0].mxu0 %v346
      %v471 = vpop.f32.mrb[0].mxu0
      %v472 = vadd.f32 %v342, %v471
      %v473 = vpop.f32.mrb[0].mxu0
      %474 = vmatprep.mubr.f32.mxu0 0.0
      %475 = vmatmul.mubr.f32.gmra.mrb[0].mxu0 %v349
      %v476 = vpop.f32.mrb[0].mxu0
      %v477 = vadd.f32 %v342, %v476
      %v478 = vpop.f32.mrb[0].mxu0
      %479 = vmatprep.mubr.f32.mxu0 0.0
      %480 = vmatmul.mubr.f32.gmra.mrb[0].mxu0 %v352
      %v481 = vpop.f32.mrb[0].mxu0
      %v482 = vadd.f32 %v342, %v481
      %v483 = vpop.f32.mrb[0].mxu0
      %484 = vmatprep.mubr.f32.mxu0 0.0
      %485 = vmatmul.mubr.f32.gmra.mrb[0].mxu0 %v355
      %v486 = vpop.f32.mrb[0].mxu0
      %v487 = vadd.f32 %v342, %v486
      %v488 = vpop.f32.mrb[0].mxu0
      %489 = vmatprep.mubr.f32.mxu0 0.0
      %490 = vmatmul.mubr.f32.gmra.mrb[0].mxu0 %v358
      %v491 = vpop.f32.mrb[0].mxu0
      %v492 = vadd.f32 %v342, %v491
      %v493 = vpop.f32.mrb[0].mxu0
      %494 = vmatprep.mubr.f32.mxu0 0.0
      %495 = vmatmul.mubr.f32.gmra.mrb[0].mxu0 %v361
      %v496 = vpop.f32.mrb[0].mxu0
      %v497 = vadd.f32 %v342, %v496
      %v498 = vpop.f32.mrb[0].mxu0
      %499 = vmatprep.mubr.f32.mxu0 0.0
      %500 = vmatmul.mubr.f32.gmra.mrb[0].mxu0 %v364
      %v501 = vpop.f32.mrb[0].mxu0
      %v502 = vadd.f32 %v342, %v501
      %v503 = vpop.f32.mrb[0].mxu0
      %504 = vmatprep.mubr.f32.mxu0 0.0
      %505 = vmatmul.mubr.f32.gmra.mrb[0].mxu0 %v367
      %v506 = vpop.f32.mrb[0].mxu0
      %v507 = vadd.f32 %v342, %v506
      %v508 = vpop.f32.mrb[0].mxu0
      %509 = vmatprep.mubr.f32.mxu0 0.0
      %510 = vmatmul.mubr.f32.gmra.mrb[0].mxu0 %v370
      %v511 = vpop.f32.mrb[0].mxu0
      %v512 = vadd.f32 %v342, %v511
      %v513 = vpop.f32.mrb[0].mxu0
      %514 = vmatprep.mubr.f32.mxu0 0.0
      %515 = vmatmul.mubr.f32.gmra.mrb[0].mxu0 %v373
      %v516 = vpop.f32.mrb[0].mxu0
      %v517 = vadd.f32 %v342, %v516
      %v518 = vpop.f32.mrb[0].mxu0
      %519 = vmatprep.mubr.f32.mxu0 0.0
      %520 = vmatmul.mubr.f32.gmra.mrb[0].mxu0 %v376
      %v521 = vpop.f32.mrb[0].mxu0
      %v522 = vadd.f32 %v342, %v521
      %v523 = vpop.f32.mrb[0].mxu0
      %524 = vmatprep.mubr.f32.mxu0 0.0
      %525 = vmatmul.mubr.f32.gmra.mrb[0].mxu0 %v379
      %v526 = vpop.f32.mrb[0].mxu0
      %v527 = vadd.f32 %v342, %v526
      %v528 = vpop.f32.mrb[0].mxu0
      %529 = vmatprep.mubr.f32.mxu0 0.0
      %530 = vmatmul.mubr.f32.gmra.mrb[0].mxu0 %v382
      %v531 = vpop.f32.mrb[0].mxu0
      %v532 = vadd.f32 %v342, %v531
      %v533 = vpop.f32.mrb[0].mxu0
      %534 = vmatprep.mubr.f32.mxu0 0.0
      %535 = vmatmul.mubr.f32.gmra.mrb[0].mxu0 %v385
      %v536 = vpop.f32.mrb[0].mxu0
      %v537 = vadd.f32 %v342, %v536
      %v538 = vpop.f32.mrb[0].mxu0
      %539 = vmatprep.mubr.f32.mxu0 0.0
      %540 = vmatmul.mubr.f32.gmra.mrb[0].mxu0 %v388
      %v541 = vpop.f32.mrb[0].mxu0
      %v542 = vadd.f32 %v342, %v541
      %v543 = vpop.f32.mrb[0].mxu0
      %544 = vmatprep.mubr.f32.mxu0 0.0
      %545 = vmatmul.mubr.f32.gmra.mrb[0].mxu0 %v391
      %v546 = vpop.f32.mrb[0].mxu0
      %v547 = vadd.f32 %v342, %v546
      %v548 = vpop.f32.mrb[0].mxu0
      %549 = vmatprep.mubr.f32.mxu0 0.0
      %550 = vmatmul.mubr.f32.gmra.mrb[0].mxu0 %v394
      %v551 = vpop.f32.mrb[0].mxu0
      %v552 = vadd.f32 %v342, %v551
      %v553 = vpop.f32.mrb[0].mxu0
      %554 = vmatprep.mubr.f32.mxu0 0.0
      %555 = vmatmul.mubr.f32.gmra.mrb[0].mxu0 %v397
      %v556 = vpop.f32.mrb[0].mxu0
      %v557 = vadd.f32 %v342, %v556
      %v558 = vpop.f32.mrb[0].mxu0
      %559 = vmatprep.mubr.f32.mxu0 0.0
      %560 = vmatmul.mubr.f32.gmra.mrb[0].mxu0 %v400
      %v561 = vpop.f32.mrb[0].mxu0
      %v562 = vadd.f32 %v342, %v561
      %v563 = vpop.f32.mrb[0].mxu0
      %564 = vmatprep.mubr.f32.mxu0 0.0
      %565 = vmatmul.mubr.f32.gmra.mrb[0].mxu0 %v403
      %v566 = vpop.f32.mrb[0].mxu0
      %v567 = vadd.f32 %v342, %v566
      %v568 = vpop.f32.mrb[0].mxu0
      %569 = vdwg.mxu0
      %v570 = vmax.f32 %v472, 0.0
      %v571 = vmax.f32 %v477, 0.0
      %v572 = vmax.f32 %v482, 0.0
      %v573 = vmax.f32 %v487, 0.0
      %v574 = vmax.f32 %v492, 0.0
      %v575 = vmax.f32 %v497, 0.0
      %v576 = vmax.f32 %v502, 0.0
      %v577 = vmax.f32 %v507, 0.0
      %v578 = vmax.f32 %v512, 0.0
      %v579 = vmax.f32 %v517, 0.0
      %v580 = vmax.f32 %v522, 0.0
      %v581 = vmax.f32 %v527, 0.0
      %v582 = vmax.f32 %v532, 0.0
      %v583 = vmax.f32 %v537, 0.0
      %v584 = vmax.f32 %v542, 0.0
      %v585 = vmax.f32 %v547, 0.0
      %v586 = vmax.f32 %v552, 0.0
      %v587 = vmax.f32 %v557, 0.0
      %v588 = vmax.f32 %v562, 0.0
      %v589 = vmax.f32 %v567, 0.0
      %vm590 = vcmask 31744
      %591 = vst.msk [vmem:[#allocation2] sm:$0xff] %vm590, %v570
      %592 = vst.msk [vmem:[#allocation2 + $0x8] sm:$0xff] %vm590, %v571
      %593 = vst.msk [vmem:[#allocation2 + $0x10] sm:$0xff] %vm590, %v572
      %594 = vst.msk [vmem:[#allocation2 + $0x18] sm:$0xff] %vm590, %v573
      %595 = vst.msk [vmem:[#allocation2 + $0x20] sm:$0xff] %vm590, %v574
      %596 = vst.msk [vmem:[#allocation2 + $0x28] sm:$0xff] %vm590, %v575
      %597 = vst.msk [vmem:[#allocation2 + $0x30] sm:$0xff] %vm590, %v576
      %598 = vst.msk [vmem:[#allocation2 + $0x38] sm:$0xff] %vm590, %v577
      %599 = vst.msk [vmem:[#allocation2 + $0x40] sm:$0xff] %vm590, %v578
      %600 = vst.msk [vmem:[#allocation2 + $0x48] sm:$0xff] %vm590, %v579
      %601 = vst.msk [vmem:[#allocation2 + $0x50] sm:$0xff] %vm590, %v580
      %602 = vst.msk [vmem:[#allocation2 + $0x58] sm:$0xff] %vm590, %v581
      %603 = vst.msk [vmem:[#allocation2 + $0x60] sm:$0xff] %vm590, %v582
      %604 = vst.msk [vmem:[#allocation2 + $0x68] sm:$0xff] %vm590, %v583
      %605 = vst.msk [vmem:[#allocation2 + $0x70] sm:$0xff] %vm590, %v584
      %606 = vst.msk [vmem:[#allocation2 + $0x78] sm:$0xff] %vm590, %v585
      %607 = vst.msk [vmem:[#allocation2 + $0x80] sm:$0xff] %vm590, %v586
      %608 = vst.msk [vmem:[#allocation2 + $0x88] sm:$0xff] %vm590, %v587
      %609 = vst.msk [vmem:[#allocation2 + $0x90] sm:$0xff] %vm590, %v588
      %610 = vst.msk [vmem:[#allocation2 + $0x98] sm:$0xff] %vm590, %v589
      %p611 = scmp.eq.s32.totalorder %s23, 0
      // Predicated region
      $region49: #{bottleneck_forward.1} parent=47 // pred_check
        %p612 = pneg %p611
      $region50: #{bottleneck_forward.1} parent=47 // pred_check_branch
        %614 = sbr.rel (%p612) target = $region52
      $region51: #{bottleneck_forward.1} parent=47 // pred_region
        %615 = vst.msk [vmem:[#allocation2] sm:$0xff] %vm590, 0.0
        %616 = vst.msk [vmem:[#allocation2 + $0x8] sm:$0xff] %vm590, 0.0
      $region52: #{bottleneck_forward.1} parent=47 // pred_fallthru
        _
      %p617 = scmp.eq.s32.totalorder %s23, 1
      // Predicated region
      $region53: #{bottleneck_forward.1} parent=47 // pred_check
        %p618 = pneg %p617
      $region54: #{bottleneck_forward.1} parent=47 // pred_check_branch
        %620 = sbr.rel (%p618) target = $region56
      $region55: #{bottleneck_forward.1} parent=47 // pred_region
        %s621 = scalar_lea.vmem [#allocation2], 144
        %622 = vst.msk [vmem:[%s621] sm:$0xff] %vm590, 0.0
        %623 = vst.msk [vmem:[%s621 + $0x8] sm:$0xff] %vm590, 0.0
      $region56: #{bottleneck_forward.1} parent=47 // pred_fallthru
        _
      %v624 = vld [vmem:[#allocation2] sm:$0xff]
      %v625 = vld [vmem:[#allocation2 + $0x8] sm:$0xff]
      %v626 = vld [vmem:[#allocation2 + $0x10] sm:$0xff]
      %v627 = vld [vmem:[#allocation2 + $0x18] sm:$0xff]
      %v628 = vld [vmem:[#allocation2 + $0x20] sm:$0xff]
      %v629 = vld [vmem:[#allocation2 + $0x28] sm:$0xff]
      %v630 = vld [vmem:[#allocation2 + $0x30] sm:$0xff]
      %v631 = vld [vmem:[#allocation2 + $0x38] sm:$0xff]
      %v632 = vld [vmem:[#allocation2 + $0x40] sm:$0xff]
      %v633 = vld [vmem:[#allocation2 + $0x48] sm:$0xff]
      %v634 = vld [vmem:[#allocation2 + $0x50] sm:$0xff]
      %v635 = vld [vmem:[#allocation2 + $0x58] sm:$0xff]
      %v636 = vld [vmem:[#allocation2 + $0x60] sm:$0xff]
      %v637 = vld [vmem:[#allocation2 + $0x68] sm:$0xff]
      %v638 = vld [vmem:[#allocation2 + $0x70] sm:$0xff]
      %v639 = vld [vmem:[#allocation2 + $0x78] sm:$0xff]
      %v640 = vld [vmem:[#allocation2 + $0x80] sm:$0xff]
      %v641 = vld [vmem:[#allocation2 + $0x88] sm:$0xff]
      %v642 = vld [vmem:[#allocation2 + $0x90] sm:$0xff]
      %v643 = vld [vmem:[#allocation2 + $0x98] sm:$0xff]
      %vm664 = vcmask 1040384
      %v665 = vrot.slane %v624, 7
      %v666 = vrot.slane %v625, 7
      %v667 = vsel %vm664, %v665, %v666
      %v668 = vrot.slane %v626, 7
      %v669 = vrot.slane %v627, 7
      %v670 = vsel %vm664, %v668, %v669
      %v671 = vrot.slane %v628, 7
      %v672 = vrot.slane %v629, 7
      %v673 = vsel %vm664, %v671, %v672
      %v674 = vrot.slane %v630, 7
      %v675 = vrot.slane %v631, 7
      %v676 = vsel %vm664, %v674, %v675
      %v677 = vrot.slane %v632, 7
      %v678 = vrot.slane %v633, 7
      %v679 = vsel %vm664, %v677, %v678
      %v680 = vrot.slane %v634, 7
      %v681 = vrot.slane %v635, 7
      %v682 = vsel %vm664, %v680, %v681
      %v683 = vrot.slane %v636, 7
      %v684 = vrot.slane %v637, 7
      %v685 = vsel %vm664, %v683, %v684
      %v686 = vrot.slane %v638, 7
      %v687 = vrot.slane %v639, 7
      %v688 = vsel %vm664, %v686, %v687
      %v689 = vrot.slane %v640, 7
      %v690 = vrot.slane %v641, 7
      %v691 = vsel %vm664, %v689, %v690
      %v692 = vrot.slane %v642, 7
      %v693 = vrot.slane %v643, 7
      %v694 = vsel %vm664, %v692, %v693
      %v715 = vsel %vm664, 0.0, %v665
      %v716 = vsel %vm664, 0.0, %v668
      %v717 = vsel %vm664, 0.0, %v671
      %v718 = vsel %vm664, 0.0, %v674
      %v719 = vsel %vm664, 0.0, %v677
      %v720 = vsel %vm664, 0.0, %v680
      %v721 = vsel %vm664, 0.0, %v683
      %v722 = vsel %vm664, 0.0, %v686
      %v723 = vsel %vm664, 0.0, %v689
      %v724 = vsel %vm664, 0.0, %v692
      %vm725 = vcmask 1046528
      %v726 = vrot.slane %v624, 1
      %v727 = vrot.slane %v625, 1
      %v728 = vsel %vm725, %v726, %v727
      %v729 = vrot.slane %v626, 1
      %v730 = vrot.slane %v627, 1
      %v731 = vsel %vm725, %v729, %v730
      %v732 = vrot.slane %v628, 1
      %v733 = vrot.slane %v629, 1
      %v734 = vsel %vm725, %v732, %v733
      %v735 = vrot.slane %v630, 1
      %v736 = vrot.slane %v631, 1
      %v737 = vsel %vm725, %v735, %v736
      %v738 = vrot.slane %v632, 1
      %v739 = vrot.slane %v633, 1
      %v740 = vsel %vm725, %v738, %v739
      %v741 = vrot.slane %v634, 1
      %v742 = vrot.slane %v635, 1
      %v743 = vsel %vm725, %v741, %v742
      %v744 = vrot.slane %v636, 1
      %v745 = vrot.slane %v637, 1
      %v746 = vsel %vm725, %v744, %v745
      %v747 = vrot.slane %v638, 1
      %v748 = vrot.slane %v639, 1
      %v749 = vsel %vm725, %v747, %v748
      %v750 = vrot.slane %v640, 1
      %v751 = vrot.slane %v641, 1
      %v752 = vsel %vm725, %v750, %v751
      %v753 = vrot.slane %v642, 1
      %v754 = vrot.slane %v643, 1
      %v755 = vsel %vm725, %v753, %v754
      %v766 = vsel %vm725, %v727, 0.0
      %v767 = vsel %vm725, %v730, 0.0
      %v768 = vsel %vm725, %v733, 0.0
      %v769 = vsel %vm725, %v736, 0.0
      %v770 = vsel %vm725, %v739, 0.0
      %v771 = vsel %vm725, %v742, 0.0
      %v772 = vsel %vm725, %v745, 0.0
      %v773 = vsel %vm725, %v748, 0.0
      %v774 = vsel %vm725, %v751, 0.0
      %v775 = vsel %vm725, %v754, 0.0
      %776 = vrot.lane.b32.xlu0 %v624, 4
      %v777 = vpop.permute.xlu0 %776
      %778 = vrot.lane.b32.xlu0 %v625, 4
      %v779 = vpop.permute.xlu0 %778
      %780 = vrot.lane.b32.xlu0 %v626, 4
      %v781 = vpop.permute.xlu0 %780
      %782 = vrot.lane.b32.xlu0 %v627, 4
      %v783 = vpop.permute.xlu0 %782
      %784 = vrot.lane.b32.xlu0 %v628, 4
      %v785 = vpop.permute.xlu0 %784
      %786 = vrot.lane.b32.xlu0 %v629, 4
      %v787 = vpop.permute.xlu0 %786
      %788 = vrot.lane.b32.xlu0 %v630, 4
      %v789 = vpop.permute.xlu0 %788
      %790 = vrot.lane.b32.xlu0 %v631, 4
      %v791 = vpop.permute.xlu0 %790
      %792 = vrot.lane.b32.xlu0 %v632, 4
      %v793 = vpop.permute.xlu0 %792
      %794 = vrot.lane.b32.xlu0 %v633, 4
      %v795 = vpop.permute.xlu0 %794
      %796 = vrot.lane.b32.xlu0 %v634, 4
      %v797 = vpop.permute.xlu0 %796
      %798 = vrot.lane.b32.xlu0 %v635, 4
      %v799 = vpop.permute.xlu0 %798
      %800 = vrot.lane.b32.xlu0 %v636, 4
      %v801 = vpop.permute.xlu0 %800
      %802 = vrot.lane.b32.xlu0 %v637, 4
      %v803 = vpop.permute.xlu0 %802
      %804 = vrot.lane.b32.xlu0 %v638, 4
      %v805 = vpop.permute.xlu0 %804
      %806 = vrot.lane.b32.xlu0 %v639, 4
      %v807 = vpop.permute.xlu0 %806
      %808 = vrot.lane.b32.xlu0 %v640, 4
      %v809 = vpop.permute.xlu0 %808
      %810 = vrot.lane.b32.xlu0 %v641, 4
      %v811 = vpop.permute.xlu0 %810
      %812 = vrot.lane.b32.xlu0 %v642, 4
      %v813 = vpop.permute.xlu0 %812
      %814 = vrot.lane.b32.xlu0 %v643, 4
      %v815 = vpop.permute.xlu0 %814
      %846 = vrot.lane.b32.xlu0 %v728, 8
      %v847 = vpop.permute.xlu0 %846
      %848 = vrot.lane.b32.xlu0 %v766, 8
      %v849 = vpop.permute.xlu0 %848
      %850 = vrot.lane.b32.xlu0 %v731, 8
      %v851 = vpop.permute.xlu0 %850
      %852 = vrot.lane.b32.xlu0 %v767, 8
      %v853 = vpop.permute.xlu0 %852
      %854 = vrot.lane.b32.xlu0 %v734, 8
      %v855 = vpop.permute.xlu0 %854
      %856 = vrot.lane.b32.xlu0 %v768, 8
      %v857 = vpop.permute.xlu0 %856
      %858 = vrot.lane.b32.xlu0 %v737, 8
      %v859 = vpop.permute.xlu0 %858
      %860 = vrot.lane.b32.xlu0 %v769, 8
      %v861 = vpop.permute.xlu0 %860
      %862 = vrot.lane.b32.xlu0 %v740, 8
      %v863 = vpop.permute.xlu0 %862
      %864 = vrot.lane.b32.xlu0 %v770, 8
      %v865 = vpop.permute.xlu0 %864
      %866 = vrot.lane.b32.xlu0 %v743, 8
      %v867 = vpop.permute.xlu0 %866
      %868 = vrot.lane.b32.xlu0 %v771, 8
      %v869 = vpop.permute.xlu0 %868
      %870 = vrot.lane.b32.xlu0 %v746, 8
      %v871 = vpop.permute.xlu0 %870
      %872 = vrot.lane.b32.xlu0 %v772, 8
      %v873 = vpop.permute.xlu0 %872
      %874 = vrot.lane.b32.xlu0 %v749, 8
      %v875 = vpop.permute.xlu0 %874
      %876 = vrot.lane.b32.xlu0 %v773, 8
      %v877 = vpop.permute.xlu0 %876
      %878 = vrot.lane.b32.xlu0 %v752, 8
      %v879 = vpop.permute.xlu0 %878
      %880 = vrot.lane.b32.xlu0 %v774, 8
      %v881 = vpop.permute.xlu0 %880
      %882 = vrot.lane.b32.xlu0 %v755, 8
      %v883 = vpop.permute.xlu0 %882
      %884 = vrot.lane.b32.xlu0 %v775, 8
      %v885 = vpop.permute.xlu0 %884
      %v906 = vsel %vm590, %v715, %v777
      %v907 = vsel %vm590, %v667, %v779
      %v908 = vsel %vm590, %v716, %v781
      %v909 = vsel %vm590, %v670, %v783
      %v910 = vsel %vm590, %v717, %v785
      %v911 = vsel %vm590, %v673, %v787
      %v912 = vsel %vm590, %v718, %v789
      %v913 = vsel %vm590, %v676, %v791
      %v914 = vsel %vm590, %v719, %v793
      %v915 = vsel %vm590, %v679, %v795
      %v916 = vsel %vm590, %v720, %v797
      %v917 = vsel %vm590, %v682, %v799
      %v918 = vsel %vm590, %v721, %v801
      %v919 = vsel %vm590, %v685, %v803
      %v920 = vsel %vm590, %v722, %v805
      %v921 = vsel %vm590, %v688, %v807
      %v922 = vsel %vm590, %v723, %v809
      %v923 = vsel %vm590, %v691, %v811
      %v924 = vsel %vm590, %v724, %v813
      %v925 = vsel %vm590, %v694, %v815
      %vm926 = vcmask 64512
      %v927 = vsel %vm926, %v906, %v847
      %v928 = vsel %vm926, %v907, %v849
      %v929 = vsel %vm926, %v908, %v851
      %v930 = vsel %vm926, %v909, %v853
      %v931 = vsel %vm926, %v910, %v855
      %v932 = vsel %vm926, %v911, %v857
      %v933 = vsel %vm926, %v912, %v859
      %v934 = vsel %vm926, %v913, %v861
      %v935 = vsel %vm926, %v914, %v863
      %v936 = vsel %vm926, %v915, %v865
      %v937 = vsel %vm926, %v916, %v867
      %v938 = vsel %vm926, %v917, %v869
      %v939 = vsel %vm926, %v918, %v871
      %v940 = vsel %vm926, %v919, %v873
      %v941 = vsel %vm926, %v920, %v875
      %v942 = vsel %vm926, %v921, %v877
      %v943 = vsel %vm926, %v922, %v879
      %v944 = vsel %vm926, %v923, %v881
      %v945 = vsel %vm926, %v924, %v883
      %v946 = vsel %vm926, %v925, %v885
      %v947 = vld [vmem:[%s3] sm:$0xff]
      %v948 = vld [vmem:[%s3 + $0x8] sm:$0xf]
      %s949 = scalar_lea.vmem %s3, 16
      %v950 = vld [vmem:[%s949] sm:$0xff]
      %v951 = vld [vmem:[%s949 + $0x8] sm:$0xf]
      %vm952 = vcmask 97280
      %v954 = vsel %vm952, %v929, 0
      %v957 = vsel %vm952, %v930, 0
      %v960 = vsel %vm952, %v931, 0
      %v963 = vsel %vm952, %v932, 0
      %v966 = vsel %vm952, %v933, 0
      %v969 = vsel %vm952, %v934, 0
      %v972 = vsel %vm952, %v935, 0
      %v975 = vsel %vm952, %v936, 0
      %v978 = vsel %vm952, %v937, 0
      %v981 = vsel %vm952, %v938, 0
      %v984 = vsel %vm952, %v939, 0
      %v987 = vsel %vm952, %v940, 0
      %v990 = vsel %vm952, %v941, 0
      %v993 = vsel %vm952, %v942, 0
      %v996 = vsel %vm952, %v943, 0
      %v999 = vsel %vm952, %v944, 0
      %vm1001 = vcmask 1043456
      %v1003 = vsel %vm1001, %v951, 0
      %1005 = vmatprep.subr.mxu0 0.0
      %1006 = vmatpush1.msra.mxu0 %v950
      %1007 = vmatprep.subr.mxu0 0.0
      %1008 = vmatpush1.msra.mxu0 %v1003
      %1009 = vmatprep.subr.mxu0 0.0
      %1010 = vmatpush1.msra.mxu0 0.0
      %1011 = vmatprep.subr.mxu0 0.0
      %1012 = vmatpush1.msra.mxu0 0.0
      %1013 = vmatprep.subr.mxu0 0.0
      %1014 = vmatpush1.msra.mxu0 0.0
      %1015 = vmatprep.subr.mxu0 0.0
      %1016 = vmatpush1.msra.mxu0 0.0
      %1017 = vmatprep.subr.mxu0 0.0
      %1018 = vmatpush1.msra.mxu0 0.0
      %1019 = vmatprep.subr.mxu0 0.0
      %1020 = vmatpush1.msra.mxu0 0.0
      %1021 = vmatprep.subr.mxu0 0.0
      %1022 = vmatpush1.msra.mxu0 0.0
      %1023 = vmatprep.subr.mxu0 0.0
      %1024 = vmatpush1.msra.mxu0 0.0
      %1025 = vmatprep.subr.mxu0 0.0
      %1026 = vmatpush1.msra.mxu0 0.0
      %1027 = vmatprep.subr.mxu0 0.0
      %1028 = vmatpush1.msra.mxu0 0.0
      %1029 = vmatprep.subr.mxu0 0.0
      %1030 = vmatpush1.msra.mxu0 0.0
      %1031 = vmatprep.subr.mxu0 0.0
      %1032 = vmatpush1.msra.mxu0 0.0
      %1033 = vmatprep.subr.mxu0 0.0
      %1034 = vmatpush1.msra.mxu0 0.0
      %1035 = vmatprep.subr.mxu0 0.0
      %1036 = vmatpush1.msra.mxu0 0.0
      %1037 = vmatprep.subr.mxu0 0.0
      %1038 = vmatpush1.msra.mxu0 0.0
      %1039 = vmatprep.subr.mxu0 0.0
      %1040 = vmatpush1.msra.mxu0 0.0
      %1041 = vmatprep.subr.mxu0 0.0
      %1042 = vmatpush1.msra.mxu0 0.0
      %1043 = vmatprep.subr.mxu0 0.0
      %1044 = vmatpush1.msra.mxu0 0.0
      %1045 = vmatprep.subr.mxu0 0.0
      %1046 = vmatpush1.msra.mxu0 0.0
      %1047 = vmatprep.subr.mxu0 0.0
      %1048 = vmatpush1.msra.mxu0 0.0
      %1049 = vmatprep.subr.mxu0 0.0
      %1050 = vmatpush1.msra.mxu0 0.0
      %1051 = vmatprep.subr.mxu0 0.0
      %1052 = vmatpush1.msra.mxu0 0.0
      %1053 = vmatprep.subr.mxu0 0.0
      %1054 = vmatpush1.msra.mxu0 0.0
      %1055 = vmatprep.subr.mxu0 0.0
      %1056 = vmatpush1.msra.mxu0 0.0
      %1057 = vmatprep.subr.mxu0 0.0
      %1058 = vmatpush1.msra.mxu0 0.0
      %1059 = vmatprep.subr.mxu0 0.0
      %1060 = vmatpush1.msra.mxu0 0.0
      %1061 = vmatprep.subr.mxu0 0.0
      %1062 = vmatpush1.msra.mxu0 0.0
      %1063 = vmatprep.subr.mxu0 0.0
      %1064 = vmatpush1.msra.mxu0 0.0
      %1065 = vmatprep.subr.mxu0 0.0
      %1066 = vmatpush1.msra.mxu0 0.0
      %1067 = vmatprep.subr.mxu0 0.0
      %1068 = vmatpush1.msra.mxu0 0.0
      %1069 = vmatprep.mubr.f32.mxu0 0.0
      %1070 = vmatmul.mubr.f32.gmra.mrb[0].mxu0 %v954
      %v1071 = vpop.f32.mrb[0].mxu0
      %v1072 = vadd.f32 0.0, %v1071
      %v1073 = vpop.f32.mrb[0].mxu0
      %1074 = vmatprep.mubr.f32.mxu0 0.0
      %1075 = vmatmul.mubr.f32.gmra.mrb[0].mxu0 %v957
      %v1076 = vpop.f32.mrb[0].mxu0
      %v1077 = vadd.f32 0.0, %v1076
      %v1078 = vpop.f32.mrb[0].mxu0
      %1079 = vmatprep.mubr.f32.mxu0 0.0
      %1080 = vmatmul.mubr.f32.gmra.mrb[0].mxu0 %v960
      %v1081 = vpop.f32.mrb[0].mxu0
      %v1082 = vadd.f32 0.0, %v1081
      %v1083 = vpop.f32.mrb[0].mxu0
      %1084 = vmatprep.mubr.f32.mxu0 0.0
      %1085 = vmatmul.mubr.f32.gmra.mrb[0].mxu0 %v963
      %v1086 = vpop.f32.mrb[0].mxu0
      %v1087 = vadd.f32 0.0, %v1086
      %v1088 = vpop.f32.mrb[0].mxu0
      %1089 = vmatprep.mubr.f32.mxu0 0.0
      %1090 = vmatmul.mubr.f32.gmra.mrb[0].mxu0 %v966
      %v1091 = vpop.f32.mrb[0].mxu0
      %v1092 = vadd.f32 0.0, %v1091
      %v1093 = vpop.f32.mrb[0].mxu0
      %1094 = vmatprep.mubr.f32.mxu0 0.0
      %1095 = vmatmul.mubr.f32.gmra.mrb[0].mxu0 %v969
      %v1096 = vpop.f32.mrb[0].mxu0
      %v1097 = vadd.f32 0.0, %v1096
      %v1098 = vpop.f32.mrb[0].mxu0
      %1099 = vmatprep.mubr.f32.mxu0 0.0
      %1100 = vmatmul.mubr.f32.gmra.mrb[0].mxu0 %v972
      %v1101 = vpop.f32.mrb[0].mxu0
      %v1102 = vadd.f32 0.0, %v1101
      %v1103 = vpop.f32.mrb[0].mxu0
      %1104 = vmatprep.mubr.f32.mxu0 0.0
      %1105 = vmatmul.mubr.f32.gmra.mrb[0].mxu0 %v975
      %v1106 = vpop.f32.mrb[0].mxu0
      %v1107 = vadd.f32 0.0, %v1106
      %v1108 = vpop.f32.mrb[0].mxu0
      %1109 = vmatprep.mubr.f32.mxu0 0.0
      %1110 = vmatmul.mubr.f32.gmra.mrb[0].mxu0 %v978
      %v1111 = vpop.f32.mrb[0].mxu0
      %v1112 = vadd.f32 0.0, %v1111
      %v1113 = vpop.f32.mrb[0].mxu0
      %1114 = vmatprep.mubr.f32.mxu0 0.0
      %1115 = vmatmul.mubr.f32.gmra.mrb[0].mxu0 %v981
      %v1116 = vpop.f32.mrb[0].mxu0
      %v1117 = vadd.f32 0.0, %v1116
      %v1118 = vpop.f32.mrb[0].mxu0
      %1119 = vmatprep.mubr.f32.mxu0 0.0
      %1120 = vmatmul.mubr.f32.gmra.mrb[0].mxu0 %v984
      %v1121 = vpop.f32.mrb[0].mxu0
      %v1122 = vadd.f32 0.0, %v1121
      %v1123 = vpop.f32.mrb[0].mxu0
      %1124 = vmatprep.mubr.f32.mxu0 0.0
      %1125 = vmatmul.mubr.f32.gmra.mrb[0].mxu0 %v987
      %v1126 = vpop.f32.mrb[0].mxu0
      %v1127 = vadd.f32 0.0, %v1126
      %v1128 = vpop.f32.mrb[0].mxu0
      %1129 = vmatprep.mubr.f32.mxu0 0.0
      %1130 = vmatmul.mubr.f32.gmra.mrb[0].mxu0 %v990
      %v1131 = vpop.f32.mrb[0].mxu0
      %v1132 = vadd.f32 0.0, %v1131
      %v1133 = vpop.f32.mrb[0].mxu0
      %1134 = vmatprep.mubr.f32.mxu0 0.0
      %1135 = vmatmul.mubr.f32.gmra.mrb[0].mxu0 %v993
      %v1136 = vpop.f32.mrb[0].mxu0
      %v1137 = vadd.f32 0.0, %v1136
      %v1138 = vpop.f32.mrb[0].mxu0
      %1139 = vmatprep.mubr.f32.mxu0 0.0
      %1140 = vmatmul.mubr.f32.gmra.mrb[0].mxu0 %v996
      %v1141 = vpop.f32.mrb[0].mxu0
      %v1142 = vadd.f32 0.0, %v1141
      %v1143 = vpop.f32.mrb[0].mxu0
      %1144 = vmatprep.mubr.f32.mxu0 0.0
      %1145 = vmatmul.mubr.f32.gmra.mrb[0].mxu0 %v999
      %v1146 = vpop.f32.mrb[0].mxu0
      %v1147 = vadd.f32 0.0, %v1146
      %v1148 = vpop.f32.mrb[0].mxu0
      %1149 = vdwg.mxu0
      %v1151 = vsel %vm952, %v927, 0
      %v1154 = vsel %vm952, %v928, 0
      %v1157 = vsel %vm1001, %v948, 0
      %1159 = vmatprep.subr.mxu0 0.0
      %1160 = vmatpush1.msra.mxu0 %v947
      %1161 = vmatprep.subr.mxu0 0.0
      %1162 = vmatpush1.msra.mxu0 %v1157
      %1163 = vmatprep.subr.mxu0 0.0
      %1164 = vmatpush1.msra.mxu0 0.0
      %1165 = vmatprep.subr.mxu0 0.0
      %1166 = vmatpush1.msra.mxu0 0.0
      %1167 = vmatprep.subr.mxu0 0.0
      %1168 = vmatpush1.msra.mxu0 0.0
      %1169 = vmatprep.subr.mxu0 0.0
      %1170 = vmatpush1.msra.mxu0 0.0
      %1171 = vmatprep.subr.mxu0 0.0
      %1172 = vmatpush1.msra.mxu0 0.0
      %1173 = vmatprep.subr.mxu0 0.0
      %1174 = vmatpush1.msra.mxu0 0.0
      %1175 = vmatprep.subr.mxu0 0.0
      %1176 = vmatpush1.msra.mxu0 0.0
      %1177 = vmatprep.subr.mxu0 0.0
      %1178 = vmatpush1.msra.mxu0 0.0
      %1179 = vmatprep.subr.mxu0 0.0
      %1180 = vmatpush1.msra.mxu0 0.0
      %1181 = vmatprep.subr.mxu0 0.0
      %1182 = vmatpush1.msra.mxu0 0.0
      %1183 = vmatprep.subr.mxu0 0.0
      %1184 = vmatpush1.msra.mxu0 0.0
      %1185 = vmatprep.subr.mxu0 0.0
      %1186 = vmatpush1.msra.mxu0 0.0
      %1187 = vmatprep.subr.mxu0 0.0
      %1188 = vmatpush1.msra.mxu0 0.0
      %1189 = vmatprep.subr.mxu0 0.0
      %1190 = vmatpush1.msra.mxu0 0.0
      %1191 = vmatprep.subr.mxu0 0.0
      %1192 = vmatpush1.msra.mxu0 0.0
      %1193 = vmatprep.subr.mxu0 0.0
      %1194 = vmatpush1.msra.mxu0 0.0
      %1195 = vmatprep.subr.mxu0 0.0
      %1196 = vmatpush1.msra.mxu0 0.0
      %1197 = vmatprep.subr.mxu0 0.0
      %1198 = vmatpush1.msra.mxu0 0.0
      %1199 = vmatprep.subr.mxu0 0.0
      %1200 = vmatpush1.msra.mxu0 0.0
      %1201 = vmatprep.subr.mxu0 0.0
      %1202 = vmatpush1.msra.mxu0 0.0
      %1203 = vmatprep.subr.mxu0 0.0
      %1204 = vmatpush1.msra.mxu0 0.0
      %1205 = vmatprep.subr.mxu0 0.0
      %1206 = vmatpush1.msra.mxu0 0.0
      %1207 = vmatprep.subr.mxu0 0.0
      %1208 = vmatpush1.msra.mxu0 0.0
      %1209 = vmatprep.subr.mxu0 0.0
      %1210 = vmatpush1.msra.mxu0 0.0
      %1211 = vmatprep.subr.mxu0 0.0
      %1212 = vmatpush1.msra.mxu0 0.0
      %1213 = vmatprep.subr.mxu0 0.0
      %1214 = vmatpush1.msra.mxu0 0.0
      %1215 = vmatprep.subr.mxu0 0.0
      %1216 = vmatpush1.msra.mxu0 0.0
      %1217 = vmatprep.subr.mxu0 0.0
      %1218 = vmatpush1.msra.mxu0 0.0
      %1219 = vmatprep.subr.mxu0 0.0
      %1220 = vmatpush1.msra.mxu0 0.0
      %1221 = vmatprep.subr.mxu0 0.0
      %1222 = vmatpush1.msra.mxu0 0.0
      %1223 = vmatprep.mubr.f32.mxu0 0.0
      %1224 = vmatmul.mubr.f32.gmra.mrb[0].mxu0 %v1151
      %v1225 = vpop.f32.mrb[0].mxu0
      %v1226 = vadd.f32 %v1072, %v1225
      %v1227 = vpop.f32.mrb[0].mxu0
      %1228 = vmatprep.mubr.f32.mxu0 0.0
      %1229 = vmatmul.mubr.f32.gmra.mrb[0].mxu0 %v1154
      %v1230 = vpop.f32.mrb[0].mxu0
      %v1231 = vadd.f32 %v1077, %v1230
      %v1232 = vpop.f32.mrb[0].mxu0
      %1233 = vmatprep.mubr.f32.mxu0 0.0
      %1234 = vmatmul.mubr.f32.gmra.mrb[0].mxu0 %v954
      %v1235 = vpop.f32.mrb[0].mxu0
      %v1236 = vadd.f32 %v1082, %v1235
      %v1237 = vpop.f32.mrb[0].mxu0
      %1238 = vmatprep.mubr.f32.mxu0 0.0
      %1239 = vmatmul.mubr.f32.gmra.mrb[0].mxu0 %v957
      %v1240 = vpop.f32.mrb[0].mxu0
      %v1241 = vadd.f32 %v1087, %v1240
      %v1242 = vpop.f32.mrb[0].mxu0
      %1243 = vmatprep.mubr.f32.mxu0 0.0
      %1244 = vmatmul.mubr.f32.gmra.mrb[0].mxu0 %v960
      %v1245 = vpop.f32.mrb[0].mxu0
      %v1246 = vadd.f32 %v1092, %v1245
      %v1247 = vpop.f32.mrb[0].mxu0
      %1248 = vmatprep.mubr.f32.mxu0 0.0
      %1249 = vmatmul.mubr.f32.gmra.mrb[0].mxu0 %v963
      %v1250 = vpop.f32.mrb[0].mxu0
      %v1251 = vadd.f32 %v1097, %v1250
      %v1252 = vpop.f32.mrb[0].mxu0
      %1253 = vmatprep.mubr.f32.mxu0 0.0
      %1254 = vmatmul.mubr.f32.gmra.mrb[0].mxu0 %v966
      %v1255 = vpop.f32.mrb[0].mxu0
      %v1256 = vadd.f32 %v1102, %v1255
      %v1257 = vpop.f32.mrb[0].mxu0
      %1258 = vmatprep.mubr.f32.mxu0 0.0
      %1259 = vmatmul.mubr.f32.gmra.mrb[0].mxu0 %v969
      %v1260 = vpop.f32.mrb[0].mxu0
      %v1261 = vadd.f32 %v1107, %v1260
      %v1262 = vpop.f32.mrb[0].mxu0
      %1263 = vmatprep.mubr.f32.mxu0 0.0
      %1264 = vmatmul.mubr.f32.gmra.mrb[0].mxu0 %v972
      %v1265 = vpop.f32.mrb[0].mxu0
      %v1266 = vadd.f32 %v1112, %v1265
      %v1267 = vpop.f32.mrb[0].mxu0
      %1268 = vmatprep.mubr.f32.mxu0 0.0
      %1269 = vmatmul.mubr.f32.gmra.mrb[0].mxu0 %v975
      %v1270 = vpop.f32.mrb[0].mxu0
      %v1271 = vadd.f32 %v1117, %v1270
      %v1272 = vpop.f32.mrb[0].mxu0
      %1273 = vmatprep.mubr.f32.mxu0 0.0
      %1274 = vmatmul.mubr.f32.gmra.mrb[0].mxu0 %v978
      %v1275 = vpop.f32.mrb[0].mxu0
      %v1276 = vadd.f32 %v1122, %v1275
      %v1277 = vpop.f32.mrb[0].mxu0
      %1278 = vmatprep.mubr.f32.mxu0 0.0
      %1279 = vmatmul.mubr.f32.gmra.mrb[0].mxu0 %v981
      %v1280 = vpop.f32.mrb[0].mxu0
      %v1281 = vadd.f32 %v1127, %v1280
      %v1282 = vpop.f32.mrb[0].mxu0
      %1283 = vmatprep.mubr.f32.mxu0 0.0
      %1284 = vmatmul.mubr.f32.gmra.mrb[0].mxu0 %v984
      %v1285 = vpop.f32.mrb[0].mxu0
      %v1286 = vadd.f32 %v1132, %v1285
      %v1287 = vpop.f32.mrb[0].mxu0
      %1288 = vmatprep.mubr.f32.mxu0 0.0
      %1289 = vmatmul.mubr.f32.gmra.mrb[0].mxu0 %v987
      %v1290 = vpop.f32.mrb[0].mxu0
      %v1291 = vadd.f32 %v1137, %v1290
      %v1292 = vpop.f32.mrb[0].mxu0
      %1293 = vmatprep.mubr.f32.mxu0 0.0
      %1294 = vmatmul.mubr.f32.gmra.mrb[0].mxu0 %v990
      %v1295 = vpop.f32.mrb[0].mxu0
      %v1296 = vadd.f32 %v1142, %v1295
      %v1297 = vpop.f32.mrb[0].mxu0
      %1298 = vmatprep.mubr.f32.mxu0 0.0
      %1299 = vmatmul.mubr.f32.gmra.mrb[0].mxu0 %v993
      %v1300 = vpop.f32.mrb[0].mxu0
      %v1301 = vadd.f32 %v1147, %v1300
      %v1302 = vpop.f32.mrb[0].mxu0
      %1303 = vdwg.mxu0
      %s1304 = scalar_lea.vmem %s3, 32
      %v1305 = vld [vmem:[%s1304] sm:$0xff]
      %v1306 = vld [vmem:[%s1304 + $0x8] sm:$0xf]
      %v1308 = vsel %vm952, %v945, 0
      %v1311 = vsel %vm952, %v946, 0
      %v1314 = vsel %vm1001, %v1306, 0
      %1316 = vmatprep.subr.mxu0 0.0
      %1317 = vmatpush1.msra.mxu0 %v1305
      %1318 = vmatprep.subr.mxu0 0.0
      %1319 = vmatpush1.msra.mxu0 %v1314
      %1320 = vmatprep.subr.mxu0 0.0
      %1321 = vmatpush1.msra.mxu0 0.0
      %1322 = vmatprep.subr.mxu0 0.0
      %1323 = vmatpush1.msra.mxu0 0.0
      %1324 = vmatprep.subr.mxu0 0.0
      %1325 = vmatpush1.msra.mxu0 0.0
      %1326 = vmatprep.subr.mxu0 0.0
      %1327 = vmatpush1.msra.mxu0 0.0
      %1328 = vmatprep.subr.mxu0 0.0
      %1329 = vmatpush1.msra.mxu0 0.0
      %1330 = vmatprep.subr.mxu0 0.0
      %1331 = vmatpush1.msra.mxu0 0.0
      %1332 = vmatprep.subr.mxu0 0.0
      %1333 = vmatpush1.msra.mxu0 0.0
      %1334 = vmatprep.subr.mxu0 0.0
      %1335 = vmatpush1.msra.mxu0 0.0
      %1336 = vmatprep.subr.mxu0 0.0
      %1337 = vmatpush1.msra.mxu0 0.0
      %1338 = vmatprep.subr.mxu0 0.0
      %1339 = vmatpush1.msra.mxu0 0.0
      %1340 = vmatprep.subr.mxu0 0.0
      %1341 = vmatpush1.msra.mxu0 0.0
      %1342 = vmatprep.subr.mxu0 0.0
      %1343 = vmatpush1.msra.mxu0 0.0
      %1344 = vmatprep.subr.mxu0 0.0
      %1345 = vmatpush1.msra.mxu0 0.0
      %1346 = vmatprep.subr.mxu0 0.0
      %1347 = vmatpush1.msra.mxu0 0.0
      %1348 = vmatprep.subr.mxu0 0.0
      %1349 = vmatpush1.msra.mxu0 0.0
      %1350 = vmatprep.subr.mxu0 0.0
      %1351 = vmatpush1.msra.mxu0 0.0
      %1352 = vmatprep.subr.mxu0 0.0
      %1353 = vmatpush1.msra.mxu0 0.0
      %1354 = vmatprep.subr.mxu0 0.0
      %1355 = vmatpush1.msra.mxu0 0.0
      %1356 = vmatprep.subr.mxu0 0.0
      %1357 = vmatpush1.msra.mxu0 0.0
      %1358 = vmatprep.subr.mxu0 0.0
      %1359 = vmatpush1.msra.mxu0 0.0
      %1360 = vmatprep.subr.mxu0 0.0
      %1361 = vmatpush1.msra.mxu0 0.0
      %1362 = vmatprep.subr.mxu0 0.0
      %1363 = vmatpush1.msra.mxu0 0.0
      %1364 = vmatprep.subr.mxu0 0.0
      %1365 = vmatpush1.msra.mxu0 0.0
      %1366 = vmatprep.subr.mxu0 0.0
      %1367 = vmatpush1.msra.mxu0 0.0
      %1368 = vmatprep.subr.mxu0 0.0
      %1369 = vmatpush1.msra.mxu0 0.0
      %1370 = vmatprep.subr.mxu0 0.0
      %1371 = vmatpush1.msra.mxu0 0.0
      %1372 = vmatprep.subr.mxu0 0.0
      %1373 = vmatpush1.msra.mxu0 0.0
      %1374 = vmatprep.subr.mxu0 0.0
      %1375 = vmatpush1.msra.mxu0 0.0
      %1376 = vmatprep.subr.mxu0 0.0
      %1377 = vmatpush1.msra.mxu0 0.0
      %1378 = vmatprep.subr.mxu0 0.0
      %1379 = vmatpush1.msra.mxu0 0.0
      %1380 = vmatprep.mubr.f32.mxu0 0.0
      %1381 = vmatmul.mubr.f32.gmra.mrb[0].mxu0 %v960
      %v1382 = vpop.f32.mrb[0].mxu0
      %v1383 = vadd.f32 0.0, %v1382
      %v1384 = vpop.f32.mrb[0].mxu0
      %1385 = vmatprep.mubr.f32.mxu0 0.0
      %1386 = vmatmul.mubr.f32.gmra.mrb[0].mxu0 %v963
      %v1387 = vpop.f32.mrb[0].mxu0
      %v1388 = vadd.f32 0.0, %v1387
      %v1389 = vpop.f32.mrb[0].mxu0
      %1390 = vmatprep.mubr.f32.mxu0 0.0
      %1391 = vmatmul.mubr.f32.gmra.mrb[0].mxu0 %v966
      %v1392 = vpop.f32.mrb[0].mxu0
      %v1393 = vadd.f32 0.0, %v1392
      %v1394 = vpop.f32.mrb[0].mxu0
      %1395 = vmatprep.mubr.f32.mxu0 0.0
      %1396 = vmatmul.mubr.f32.gmra.mrb[0].mxu0 %v969
      %v1397 = vpop.f32.mrb[0].mxu0
      %v1398 = vadd.f32 0.0, %v1397
      %v1399 = vpop.f32.mrb[0].mxu0
      %1400 = vmatprep.mubr.f32.mxu0 0.0
      %1401 = vmatmul.mubr.f32.gmra.mrb[0].mxu0 %v972
      %v1402 = vpop.f32.mrb[0].mxu0
      %v1403 = vadd.f32 0.0, %v1402
      %v1404 = vpop.f32.mrb[0].mxu0
      %1405 = vmatprep.mubr.f32.mxu0 0.0
      %1406 = vmatmul.mubr.f32.gmra.mrb[0].mxu0 %v975
      %v1407 = vpop.f32.mrb[0].mxu0
      %v1408 = vadd.f32 0.0, %v1407
      %v1409 = vpop.f32.mrb[0].mxu0
      %1410 = vmatprep.mubr.f32.mxu0 0.0
      %1411 = vmatmul.mubr.f32.gmra.mrb[0].mxu0 %v978
      %v1412 = vpop.f32.mrb[0].mxu0
      %v1413 = vadd.f32 0.0, %v1412
      %v1414 = vpop.f32.mrb[0].mxu0
      %1415 = vmatprep.mubr.f32.mxu0 0.0
      %1416 = vmatmul.mubr.f32.gmra.mrb[0].mxu0 %v981
      %v1417 = vpop.f32.mrb[0].mxu0
      %v1418 = vadd.f32 0.0, %v1417
      %v1419 = vpop.f32.mrb[0].mxu0
      %1420 = vmatprep.mubr.f32.mxu0 0.0
      %1421 = vmatmul.mubr.f32.gmra.mrb[0].mxu0 %v984
      %v1422 = vpop.f32.mrb[0].mxu0
      %v1423 = vadd.f32 0.0, %v1422
      %v1424 = vpop.f32.mrb[0].mxu0
      %1425 = vmatprep.mubr.f32.mxu0 0.0
      %1426 = vmatmul.mubr.f32.gmra.mrb[0].mxu0 %v987
      %v1427 = vpop.f32.mrb[0].mxu0
      %v1428 = vadd.f32 0.0, %v1427
      %v1429 = vpop.f32.mrb[0].mxu0
      %1430 = vmatprep.mubr.f32.mxu0 0.0
      %1431 = vmatmul.mubr.f32.gmra.mrb[0].mxu0 %v990
      %v1432 = vpop.f32.mrb[0].mxu0
      %v1433 = vadd.f32 0.0, %v1432
      %v1434 = vpop.f32.mrb[0].mxu0
      %1435 = vmatprep.mubr.f32.mxu0 0.0
      %1436 = vmatmul.mubr.f32.gmra.mrb[0].mxu0 %v993
      %v1437 = vpop.f32.mrb[0].mxu0
      %v1438 = vadd.f32 0.0, %v1437
      %v1439 = vpop.f32.mrb[0].mxu0
      %1440 = vmatprep.mubr.f32.mxu0 0.0
      %1441 = vmatmul.mubr.f32.gmra.mrb[0].mxu0 %v996
      %v1442 = vpop.f32.mrb[0].mxu0
      %v1443 = vadd.f32 0.0, %v1442
      %v1444 = vpop.f32.mrb[0].mxu0
      %1445 = vmatprep.mubr.f32.mxu0 0.0
      %1446 = vmatmul.mubr.f32.gmra.mrb[0].mxu0 %v999
      %v1447 = vpop.f32.mrb[0].mxu0
      %v1448 = vadd.f32 0.0, %v1447
      %v1449 = vpop.f32.mrb[0].mxu0
      %1450 = vmatprep.mubr.f32.mxu0 0.0
      %1451 = vmatmul.mubr.f32.gmra.mrb[0].mxu0 %v1308
      %v1452 = vpop.f32.mrb[0].mxu0
      %v1453 = vadd.f32 0.0, %v1452
      %v1454 = vpop.f32.mrb[0].mxu0
      %1455 = vmatprep.mubr.f32.mxu0 0.0
      %1456 = vmatmul.mubr.f32.gmra.mrb[0].mxu0 %v1311
      %v1457 = vpop.f32.mrb[0].mxu0
      %v1458 = vadd.f32 0.0, %v1457
      %v1459 = vpop.f32.mrb[0].mxu0
      %1460 = vdwg.mxu0
      %v1461 = vadd.f32 %v1226, %v1383
      %v1462 = vadd.f32 %v1231, %v1388
      %v1463 = vadd.f32 %v1236, %v1393
      %v1464 = vadd.f32 %v1241, %v1398
      %v1465 = vadd.f32 %v1246, %v1403
      %v1466 = vadd.f32 %v1251, %v1408
      %v1467 = vadd.f32 %v1256, %v1413
      %v1468 = vadd.f32 %v1261, %v1418
      %v1469 = vadd.f32 %v1266, %v1423
      %v1470 = vadd.f32 %v1271, %v1428
      %v1471 = vadd.f32 %v1276, %v1433
      %v1472 = vadd.f32 %v1281, %v1438
      %v1473 = vadd.f32 %v1286, %v1443
      %v1474 = vadd.f32 %v1291, %v1448
      %v1475 = vadd.f32 %v1296, %v1453
      %v1476 = vadd.f32 %v1301, %v1458
      %v1477 = vld [vmem:[%s4] sm:$0x1]
      %v1479 = vlaneseq
      %v1480 = vshrl.u32 %v1479, 7
      %v1481 = vsub.s32 0, %v1480
      %v1482 = vrot.slane %v1477, %v1481
      %v1484 = vadd.f32 %v1461, %v1482
      %v1485 = vadd.f32 %v1462, %v1482
      %v1486 = vadd.f32 %v1463, %v1482
      %v1487 = vadd.f32 %v1464, %v1482
      %v1488 = vadd.f32 %v1465, %v1482
      %v1489 = vadd.f32 %v1466, %v1482
      %v1490 = vadd.f32 %v1467, %v1482
      %v1491 = vadd.f32 %v1468, %v1482
      %v1492 = vadd.f32 %v1469, %v1482
      %v1493 = vadd.f32 %v1470, %v1482
      %v1494 = vadd.f32 %v1471, %v1482
      %v1495 = vadd.f32 %v1472, %v1482
      %v1496 = vadd.f32 %v1473, %v1482
      %v1497 = vadd.f32 %v1474, %v1482
      %v1498 = vadd.f32 %v1475, %v1482
      %v1499 = vadd.f32 %v1476, %v1482
      %v1500 = vmax.f32 %v1484, 0.0
      %v1501 = vmax.f32 %v1485, 0.0
      %v1502 = vmax.f32 %v1486, 0.0
      %v1503 = vmax.f32 %v1487, 0.0
      %v1504 = vmax.f32 %v1488, 0.0
      %v1505 = vmax.f32 %v1489, 0.0
      %v1506 = vmax.f32 %v1490, 0.0
      %v1507 = vmax.f32 %v1491, 0.0
      %v1508 = vmax.f32 %v1492, 0.0
      %v1509 = vmax.f32 %v1493, 0.0
      %v1510 = vmax.f32 %v1494, 0.0
      %v1511 = vmax.f32 %v1495, 0.0
      %v1512 = vmax.f32 %v1496, 0.0
      %v1513 = vmax.f32 %v1497, 0.0
      %v1514 = vmax.f32 %v1498, 0.0
      %v1515 = vmax.f32 %v1499, 0.0
      %v1516 = vld [vmem:[%s5] sm:$0xf]
      %s1517 = scalar_lea.vmem %s305, 16
      %v1518 = vld [vmem:[%s1517] sm:$0xff]
      %v1519 = vld [vmem:[%s1517 + $0x8] sm:$0xff]
      %v1520 = vld [vmem:[%s1517 + $0x10] sm:$0xff]
      %v1521 = vld [vmem:[%s1517 + $0x18] sm:$0xff]
      %v1522 = vld [vmem:[%s1517 + $0x20] sm:$0xff]
      %v1523 = vld [vmem:[%s1517 + $0x28] sm:$0xff]
      %v1524 = vld [vmem:[%s1517 + $0x30] sm:$0xff]
      %v1525 = vld [vmem:[%s1517 + $0x38] sm:$0xff]
      %v1526 = vld [vmem:[%s1517 + $0x40] sm:$0xff]
      %v1527 = vld [vmem:[%s1517 + $0x48] sm:$0xff]
      %v1528 = vld [vmem:[%s1517 + $0x50] sm:$0xff]
      %v1529 = vld [vmem:[%s1517 + $0x58] sm:$0xff]
      %v1530 = vld [vmem:[%s1517 + $0x60] sm:$0xff]
      %v1531 = vld [vmem:[%s1517 + $0x68] sm:$0xff]
      %v1532 = vld [vmem:[%s1517 + $0x70] sm:$0xff]
      %v1533 = vld [vmem:[%s1517 + $0x78] sm:$0xff]
      %v1534 = vld [vmem:[%s6] sm:$0x1]
      %v1536 = vlaneseq
      %v1537 = vshrl.u32 %v1536, 7
      %v1538 = vsub.s32 0, %v1537
      %v1539 = vrot.slane %v1534, %v1538
      %v1542 = vsel %vm590, %v1500, 0
      %v1545 = vsel %vm590, %v1501, 0
      %v1548 = vsel %vm590, %v1502, 0
      %v1551 = vsel %vm590, %v1503, 0
      %v1554 = vsel %vm590, %v1504, 0
      %v1557 = vsel %vm590, %v1505, 0
      %v1560 = vsel %vm590, %v1506, 0
      %v1563 = vsel %vm590, %v1507, 0
      %v1566 = vsel %vm590, %v1508, 0
      %v1569 = vsel %vm590, %v1509, 0
      %v1572 = vsel %vm590, %v1510, 0
      %v1575 = vsel %vm590, %v1511, 0
      %v1578 = vsel %vm590, %v1512, 0
      %v1581 = vsel %vm590, %v1513, 0
      %v1584 = vsel %vm590, %v1514, 0
      %v1587 = vsel %vm590, %v1515, 0
      %v1590 = vsel %vm1001, %v1516, 0
      %1592 = vmatprep.subr.mxu0 0.0
      %1593 = vmatpush1.msra.mxu0 %v1590
      %1594 = vmatprep.subr.mxu0 0.0
      %1595 = vmatpush1.msra.mxu0 0.0
      %1596 = vmatprep.subr.mxu0 0.0
      %1597 = vmatpush1.msra.mxu0 0.0
      %1598 = vmatprep.subr.mxu0 0.0
      %1599 = vmatpush1.msra.mxu0 0.0
      %1600 = vmatprep.subr.mxu0 0.0
      %1601 = vmatpush1.msra.mxu0 0.0
      %1602 = vmatprep.subr.mxu0 0.0
      %1603 = vmatpush1.msra.mxu0 0.0
      %1604 = vmatprep.subr.mxu0 0.0
      %1605 = vmatpush1.msra.mxu0 0.0
      %1606 = vmatprep.subr.mxu0 0.0
      %1607 = vmatpush1.msra.mxu0 0.0
      %1608 = vmatprep.subr.mxu0 0.0
      %1609 = vmatpush1.msra.mxu0 0.0
      %1610 = vmatprep.subr.mxu0 0.0
      %1611 = vmatpush1.msra.mxu0 0.0
      %1612 = vmatprep.subr.mxu0 0.0
      %1613 = vmatpush1.msra.mxu0 0.0
      %1614 = vmatprep.subr.mxu0 0.0
      %1615 = vmatpush1.msra.mxu0 0.0
      %1616 = vmatprep.subr.mxu0 0.0
      %1617 = vmatpush1.msra.mxu0 0.0
      %1618 = vmatprep.subr.mxu0 0.0
      %1619 = vmatpush1.msra.mxu0 0.0
      %1620 = vmatprep.subr.mxu0 0.0
      %1621 = vmatpush1.msra.mxu0 0.0
      %1622 = vmatprep.subr.mxu0 0.0
      %1623 = vmatpush1.msra.mxu0 0.0
      %1624 = vmatprep.subr.mxu0 0.0
      %1625 = vmatpush1.msra.mxu0 0.0
      %1626 = vmatprep.subr.mxu0 0.0
      %1627 = vmatpush1.msra.mxu0 0.0
      %1628 = vmatprep.subr.mxu0 0.0
      %1629 = vmatpush1.msra.mxu0 0.0
      %1630 = vmatprep.subr.mxu0 0.0
      %1631 = vmatpush1.msra.mxu0 0.0
      %1632 = vmatprep.subr.mxu0 0.0
      %1633 = vmatpush1.msra.mxu0 0.0
      %1634 = vmatprep.subr.mxu0 0.0
      %1635 = vmatpush1.msra.mxu0 0.0
      %1636 = vmatprep.subr.mxu0 0.0
      %1637 = vmatpush1.msra.mxu0 0.0
      %1638 = vmatprep.subr.mxu0 0.0
      %1639 = vmatpush1.msra.mxu0 0.0
      %1640 = vmatprep.subr.mxu0 0.0
      %1641 = vmatpush1.msra.mxu0 0.0
      %1642 = vmatprep.subr.mxu0 0.0
      %1643 = vmatpush1.msra.mxu0 0.0
      %1644 = vmatprep.subr.mxu0 0.0
      %1645 = vmatpush1.msra.mxu0 0.0
      %1646 = vmatprep.subr.mxu0 0.0
      %1647 = vmatpush1.msra.mxu0 0.0
      %1648 = vmatprep.subr.mxu0 0.0
      %1649 = vmatpush1.msra.mxu0 0.0
      %1650 = vmatprep.subr.mxu0 0.0
      %1651 = vmatpush1.msra.mxu0 0.0
      %1652 = vmatprep.subr.mxu0 0.0
      %1653 = vmatpush1.msra.mxu0 0.0
      %1654 = vmatprep.subr.mxu0 0.0
      %1655 = vmatpush1.msra.mxu0 0.0
      %1656 = vmatprep.mubr.f32.mxu0 0.0
      %1657 = vmatmul.mubr.f32.gmra.mrb[0].mxu0 %v1542
      %v1658 = vpop.f32.mrb[0].mxu0
      %v1659 = vadd.f32 %v1539, %v1658
      %v1660 = vpop.f32.mrb[0].mxu0
      %1661 = vmatprep.mubr.f32.mxu0 0.0
      %1662 = vmatmul.mubr.f32.gmra.mrb[0].mxu0 %v1545
      %v1663 = vpop.f32.mrb[0].mxu0
      %v1664 = vadd.f32 %v1539, %v1663
      %v1665 = vpop.f32.mrb[0].mxu0
      %1666 = vmatprep.mubr.f32.mxu0 0.0
      %1667 = vmatmul.mubr.f32.gmra.mrb[0].mxu0 %v1548
      %v1668 = vpop.f32.mrb[0].mxu0
      %v1669 = vadd.f32 %v1539, %v1668
      %v1670 = vpop.f32.mrb[0].mxu0
      %1671 = vmatprep.mubr.f32.mxu0 0.0
      %1672 = vmatmul.mubr.f32.gmra.mrb[0].mxu0 %v1551
      %v1673 = vpop.f32.mrb[0].mxu0
      %v1674 = vadd.f32 %v1539, %v1673
      %v1675 = vpop.f32.mrb[0].mxu0
      %1676 = vmatprep.mubr.f32.mxu0 0.0
      %1677 = vmatmul.mubr.f32.gmra.mrb[0].mxu0 %v1554
      %v1678 = vpop.f32.mrb[0].mxu0
      %v1679 = vadd.f32 %v1539, %v1678
      %v1680 = vpop.f32.mrb[0].mxu0
      %1681 = vmatprep.mubr.f32.mxu0 0.0
      %1682 = vmatmul.mubr.f32.gmra.mrb[0].mxu0 %v1557
      %v1683 = vpop.f32.mrb[0].mxu0
      %v1684 = vadd.f32 %v1539, %v1683
      %v1685 = vpop.f32.mrb[0].mxu0
      %1686 = vmatprep.mubr.f32.mxu0 0.0
      %1687 = vmatmul.mubr.f32.gmra.mrb[0].mxu0 %v1560
      %v1688 = vpop.f32.mrb[0].mxu0
      %v1689 = vadd.f32 %v1539, %v1688
      %v1690 = vpop.f32.mrb[0].mxu0
      %1691 = vmatprep.mubr.f32.mxu0 0.0
      %1692 = vmatmul.mubr.f32.gmra.mrb[0].mxu0 %v1563
      %v1693 = vpop.f32.mrb[0].mxu0
      %v1694 = vadd.f32 %v1539, %v1693
      %v1695 = vpop.f32.mrb[0].mxu0
      %1696 = vmatprep.mubr.f32.mxu0 0.0
      %1697 = vmatmul.mubr.f32.gmra.mrb[0].mxu0 %v1566
      %v1698 = vpop.f32.mrb[0].mxu0
      %v1699 = vadd.f32 %v1539, %v1698
      %v1700 = vpop.f32.mrb[0].mxu0
      %1701 = vmatprep.mubr.f32.mxu0 0.0
      %1702 = vmatmul.mubr.f32.gmra.mrb[0].mxu0 %v1569
      %v1703 = vpop.f32.mrb[0].mxu0
      %v1704 = vadd.f32 %v1539, %v1703
      %v1705 = vpop.f32.mrb[0].mxu0
      %1706 = vmatprep.mubr.f32.mxu0 0.0
      %1707 = vmatmul.mubr.f32.gmra.mrb[0].mxu0 %v1572
      %v1708 = vpop.f32.mrb[0].mxu0
      %v1709 = vadd.f32 %v1539, %v1708
      %v1710 = vpop.f32.mrb[0].mxu0
      %1711 = vmatprep.mubr.f32.mxu0 0.0
      %1712 = vmatmul.mubr.f32.gmra.mrb[0].mxu0 %v1575
      %v1713 = vpop.f32.mrb[0].mxu0
      %v1714 = vadd.f32 %v1539, %v1713
      %v1715 = vpop.f32.mrb[0].mxu0
      %1716 = vmatprep.mubr.f32.mxu0 0.0
      %1717 = vmatmul.mubr.f32.gmra.mrb[0].mxu0 %v1578
      %v1718 = vpop.f32.mrb[0].mxu0
      %v1719 = vadd.f32 %v1539, %v1718
      %v1720 = vpop.f32.mrb[0].mxu0
      %1721 = vmatprep.mubr.f32.mxu0 0.0
      %1722 = vmatmul.mubr.f32.gmra.mrb[0].mxu0 %v1581
      %v1723 = vpop.f32.mrb[0].mxu0
      %v1724 = vadd.f32 %v1539, %v1723
      %v1725 = vpop.f32.mrb[0].mxu0
      %1726 = vmatprep.mubr.f32.mxu0 0.0
      %1727 = vmatmul.mubr.f32.gmra.mrb[0].mxu0 %v1584
      %v1728 = vpop.f32.mrb[0].mxu0
      %v1729 = vadd.f32 %v1539, %v1728
      %v1730 = vpop.f32.mrb[0].mxu0
      %1731 = vmatprep.mubr.f32.mxu0 0.0
      %1732 = vmatmul.mubr.f32.gmra.mrb[0].mxu0 %v1587
      %v1733 = vpop.f32.mrb[0].mxu0
      %v1734 = vadd.f32 %v1539, %v1733
      %v1735 = vpop.f32.mrb[0].mxu0
      %1736 = vdwg.mxu0
      %v1737 = vadd.f32 %v1659, %v1518
      %v1738 = vadd.f32 %v1664, %v1519
      %v1739 = vadd.f32 %v1669, %v1520
      %v1740 = vadd.f32 %v1674, %v1521
      %v1741 = vadd.f32 %v1679, %v1522
      %v1742 = vadd.f32 %v1684, %v1523
      %v1743 = vadd.f32 %v1689, %v1524
      %v1744 = vadd.f32 %v1694, %v1525
      %v1745 = vadd.f32 %v1699, %v1526
      %v1746 = vadd.f32 %v1704, %v1527
      %v1747 = vadd.f32 %v1709, %v1528
      %v1748 = vadd.f32 %v1714, %v1529
      %v1749 = vadd.f32 %v1719, %v1530
      %v1750 = vadd.f32 %v1724, %v1531
      %v1751 = vadd.f32 %v1729, %v1532
      %v1752 = vadd.f32 %v1734, %v1533
      %v1753 = vmax.f32 %v1737, 0.0
      %v1754 = vmax.f32 %v1738, 0.0
      %v1755 = vmax.f32 %v1739, 0.0
      %v1756 = vmax.f32 %v1740, 0.0
      %v1757 = vmax.f32 %v1741, 0.0
      %v1758 = vmax.f32 %v1742, 0.0
      %v1759 = vmax.f32 %v1743, 0.0
      %v1760 = vmax.f32 %v1744, 0.0
      %v1761 = vmax.f32 %v1745, 0.0
      %v1762 = vmax.f32 %v1746, 0.0
      %v1763 = vmax.f32 %v1747, 0.0
      %v1764 = vmax.f32 %v1748, 0.0
      %v1765 = vmax.f32 %v1749, 0.0
      %v1766 = vmax.f32 %v1750, 0.0
      %v1767 = vmax.f32 %v1751, 0.0
      %v1768 = vmax.f32 %v1752, 0.0
      %1769 = vst.msk [vmem:[%s314] sm:$0xff] %vm344, %v1753
      %1770 = vst.msk [vmem:[%s314 + $0x8] sm:$0xff] %vm344, %v1754
      %1771 = vst.msk [vmem:[%s314 + $0x10] sm:$0xff] %vm344, %v1755
      %1772 = vst.msk [vmem:[%s314 + $0x18] sm:$0xff] %vm344, %v1756
      %1773 = vst.msk [vmem:[%s314 + $0x20] sm:$0xff] %vm344, %v1757
      %1774 = vst.msk [vmem:[%s314 + $0x28] sm:$0xff] %vm344, %v1758
      %1775 = vst.msk [vmem:[%s314 + $0x30] sm:$0xff] %vm344, %v1759
      %1776 = vst.msk [vmem:[%s314 + $0x38] sm:$0xff] %vm344, %v1760
      %1777 = vst.msk [vmem:[%s314 + $0x40] sm:$0xff] %vm344, %v1761
      %1778 = vst.msk [vmem:[%s314 + $0x48] sm:$0xff] %vm344, %v1762
      %1779 = vst.msk [vmem:[%s314 + $0x50] sm:$0xff] %vm344, %v1763
      %1780 = vst.msk [vmem:[%s314 + $0x58] sm:$0xff] %vm344, %v1764
      %1781 = vst.msk [vmem:[%s314 + $0x60] sm:$0xff] %vm344, %v1765
      %1782 = vst.msk [vmem:[%s314 + $0x68] sm:$0xff] %vm344, %v1766
      %1783 = vst.msk [vmem:[%s314 + $0x70] sm:$0xff] %vm344, %v1767
      %1784 = vst.msk [vmem:[%s314 + $0x78] sm:$0xff] %vm344, %v1768
      %p1785 = scmp.lt.s32.totalorder %s22, 1
      %s1786 = scalar_select %p1785, %s22, 1
      %p1787 = scmp.lt.s32.totalorder %s23, 1
      %s1788 = scalar_select %p1787, %s23, 1
      %s1789 = smul.addr %s1788, 16
      %s1790 = smul.addr %s1786, 32
      %s1791 = sadd.s32 %s1789, %s1790
      %s1792 = smul.addr %s1791, 8
      %s1793 = scalar_lea.vmem %s7, %s1792
      // Predicated region
      $region57: #{bottleneck_forward.1} parent=47 // pred_check
        %p1794 = pneg %p204
      $region58: #{bottleneck_forward.1} parent=47 // pred_check_branch
        %1796 = sbr.rel (%p1794) target = $region60
      $region59: #{bottleneck_forward.1} parent=47 // pred_region
        _
      $region60: #{bottleneck_forward.1} parent=47 // pred_fallthru
        _
    $region48: #{bottleneck_forward.1} parent=5 // pred_fallthru
      _
    %p1797 = scmp.le.s32.totalorder 2, %s13
    // Predicated region
    $region61: #{bottleneck_forward.1} parent=5 // pred_check
      %p1798 = pneg %p1797
    $region62: #{bottleneck_forward.1} parent=5 // pred_check_branch
      %1800 = sbr.rel (%p1798) target = $region64
    $region63: #{bottleneck_forward.1} parent=5 // pred_region
      %s1801 = ssub.s32 %s13, 2
      // Predicated region
      $region65: #{bottleneck_forward.1} parent=63 // pred_check
        %p1802 = pneg %p210
      $region66: #{bottleneck_forward.1} parent=63 // pred_check_branch
        %1804 = sbr.rel (%p1802) target = $region68
      $region67: #{bottleneck_forward.1} parent=63 // pred_region
        %p1805 = scmp.lt.s32.totalorder %s24, 1
        %s1806 = scalar_select %p1805, %s24, 1
        %p1807 = scmp.lt.s32.totalorder %s25, 1
        %s1808 = scalar_select %p1807, %s25, 1
        %s1809 = smul.addr %s1808, 16
        %s1810 = smul.addr %s1806, 32
        %s1811 = sadd.s32 %s1809, %s1810
        %s1812 = smul.addr %s1811, 8
        %s1813 = scalar_lea.vmem %s7, %s1812
      $region68: #{bottleneck_forward.1} parent=63 // pred_fallthru
        _
    $region64: #{bottleneck_forward.1} parent=5 // pred_fallthru
      _
  $region6: #{bottleneck_forward.1} parent=0 // loop_footer
    %s17 = sadd.s32 1, %s13
  $region7: #{bottleneck_forward.1} parent=0 // loop_footer_branch
    %12 = sbr.rel target = $region3
  $region8: #{bottleneck_forward.1} parent=0 // loop_exit
    _

</llo_original>
